<compile_context>
chip_gen: v5e
topology: v5e:2x2
jax: 0.10.0
libtpu: 0.0.40
codegen_flags: <defaults>
</compile_context>

<pallas_src>
import jax
import jax.numpy as jnp
from jax.experimental import pallas as pl
from jax.experimental.pallas import tpu as pltpu

_SUBLANE = 8  # f32 sublane granule


def lstm_linear_kernel(x_ref, wih_ref, b_ref, whh_ref, wlin_ref, blin_ref,
                       out_ref, xp_ref):
    """Whole forward pass in one invocation.

    x_ref   : (T*Bp, I)   time-major flattened input (batch padded to Bp=8k rows)
    wih_ref : (I,  4*Hp)  input->hidden weights, gates [i,f,o,g] in Hp-wide blocks
    b_ref   : (1,  4*Hp)  combined bias (b_ih + b_hh), same gate layout
    whh_ref : (Hp, 4*Hp)  hidden->hidden weights, same gate layout
    wlin_ref: (1,  Hp)    final linear weight row (O == 1 path)  [else (Hp, O)]
    blin_ref: (1,  O)     final linear bias
    out_ref : (Bp, O)     prediction from the last hidden state (rows >= B are pad)
    xp_ref  : (T*Bp, 4*Hp) VMEM scratch for the hoisted input projection
    """
    TB, I = x_ref.shape
    Hp = whh_ref.shape[0]
    Bp, O = out_ref.shape
    T = TB // Bp

    # ---- hoisted input projection: independent of h, computed once for all T ----
    x_all = x_ref[...]                                    # (T*Bp, I)
    wih = wih_ref[...]                                    # (I, 4*Hp)
    if I == 1:
        xp = x_all * wih                                  # VPU broadcast multiply
    else:
        xp = jnp.dot(x_all, wih, preferred_element_type=jnp.float32)
    # Park it in VMEM scratch so only an (8, 4*Hp) slice is live per step.
    xp_ref[...] = xp + b_ref[...]                         # bias folded in

    h = jnp.zeros((Bp, Hp), jnp.float32)
    c = jnp.zeros((Bp, Hp), jnp.float32)

    # ---- serial recurrence: T small & static -> fully unrolled, h/c in vregs ----
    for t in range(T):
        # Re-read W_hh from VMEM each step: streamed per MXU pass instead of being
        # pinned as one 256 KiB live value across the unrolled loop.
        gates = xp_ref[t * Bp:(t + 1) * Bp, :] + jnp.dot(
            h, whh_ref[...], preferred_element_type=jnp.float32)  # (Bp, 4*Hp)
        # Gate layout [i, f, o, g]: one wide sigmoid covers the first 3 gate blocks.
        sig = jax.nn.sigmoid(gates[:, :3 * Hp])
        i = sig[:, 0 * Hp:1 * Hp]
        f = sig[:, 1 * Hp:2 * Hp]
        o = sig[:, 2 * Hp:3 * Hp]
        g = jnp.tanh(gates[:, 3 * Hp:4 * Hp])
        c = f * c + i * g
        h = o * jnp.tanh(c)

    # ---- final linear on h_T ----
    if O == 1 and wlin_ref.shape[0] == 1:
        # (Bp, Hp) * (1, Hp) -> lane reduction; avoids a 1-lane-wide MXU pass.
        out_ref[...] = (jnp.sum(h * wlin_ref[...], axis=-1, keepdims=True)
                        + blin_ref[...])
    else:
        out_ref[...] = (jnp.dot(h, wlin_ref[...], preferred_element_type=jnp.float32)
                        + blin_ref[...])


def sp500_forward(x, params):
    """Pallas equivalent of SP500Predictor.forward: LSTM over time, Linear on h_T."""
    B, T, I = x.shape
    Hp, G = params["whh"].shape
    O = params["blin"].shape[1]

    # Pad batch to the f32 sublane granule so every per-step slice is tile-aligned.
    Bp = ((B + _SUBLANE - 1) // _SUBLANE) * _SUBLANE
    xb = jnp.pad(x, ((0, Bp - B), (0, 0), (0, 0)))
    # Layout prep only: time-major flatten so per-step rows are contiguous blocks.
    x2d = jnp.transpose(xb, (1, 0, 2)).reshape(T * Bp, I)

    vmem = pltpu.MemorySpace.VMEM
    out = pl.pallas_call(
        lstm_linear_kernel,
        out_shape=jax.ShapeDtypeStruct((Bp, O), jnp.float32),
        # No grid and untiled full-ref VMEM specs: no pipeline double-buffering.
        in_specs=[
            pl.BlockSpec(memory_space=vmem),   # full sequence
            pl.BlockSpec(memory_space=vmem),   # W_ih packed
            pl.BlockSpec(memory_space=vmem),   # bias packed
            pl.BlockSpec(memory_space=vmem),   # W_hh packed
            pl.BlockSpec(memory_space=vmem),   # linear weight
            pl.BlockSpec(memory_space=vmem),   # linear bias
        ],
        out_specs=pl.BlockSpec(memory_space=vmem),
        scratch_shapes=[pltpu.VMEM((T * Bp, G), jnp.float32)],
        compiler_params=pltpu.CompilerParams(vmem_limit_bytes=32 * 1024 * 1024),
    )(x2d, params["wih"], params["b"], params["whh"],
      params["wlin"], params["blin"])
    return out[:B]


def _assert_pad_zero(wih, whh, b, wlin, H, Hp, O):
    """The zero-pad invariant is what keeps padded h/c lanes exactly 0."""
    if Hp == H:
        return
    ok = bool(jnp.all(whh[H:, :] == 0))
    for g in range(4):
        sl = slice(g * Hp + H, (g + 1) * Hp)
        ok &= bool(jnp.all(wih[:, sl] == 0))
        ok &= bool(jnp.all(whh[:, sl] == 0))
        ok &= bool(jnp.all(b[:, sl] == 0))
    if O == 1:
        ok &= bool(jnp.all(wlin[:, H:] == 0))
    else:
        ok &= bool(jnp.all(wlin[H:, :] == 0))
    assert ok, "padded gate lanes must be exactly zero"


def init_params(key, input_size=1, hidden_size=50, output_size=1):
    """PyTorch-shaped init (gate order i,f,g,o), then repack for the kernel."""
    H, I, O = hidden_size, input_size, output_size
    Hp = ((H + 127) // 128) * 128        # pad each gate to a full 128-lane block
    pad = Hp - H
    k = 1.0 / jnp.sqrt(jnp.float32(H))
    ks = jax.random.split(key, 6)
    w_ih = jax.random.uniform(ks[0], (4 * H, I), jnp.float32, -k, k)   # weight_ih_l0
    w_hh = jax.random.uniform(ks[1], (4 * H, H), jnp.float32, -k, k)   # weight_hh_l0
    b_ih = jax.random.uniform(ks[2], (4 * H,), jnp.float32, -k, k)
    b_hh = jax.random.uniform(ks[3], (4 * H,), jnp.float32, -k, k)
    w_lin = jax.random.uniform(ks[4], (O, H), jnp.float32, -k, k)      # nn.Linear weight
    b_lin = jax.random.uniform(ks[5], (O,), jnp.float32, -k, k)

    raw = dict(w_ih=w_ih, w_hh=w_hh, b_ih=b_ih, b_hh=b_hh, w_lin=w_lin, b_lin=b_lin)

    # PyTorch gate order is [i, f, g, o]; repack as [i, f, o, g] so the three
    # sigmoid gates are one contiguous 3*Hp slab in the fused kernel.
    perm = jnp.array([0, 1, 3, 2])
    wih_g = jnp.transpose(w_ih.reshape(4, H, I), (0, 2, 1))[perm]      # (4, I, H)
    whh_g = jnp.transpose(w_hh.reshape(4, H, H), (0, 2, 1))[perm]      # (4, H, H)
    b_g = (b_ih + b_hh).reshape(4, H)[perm]

    # Zero padding is inert: padded gate lanes give i=f=o=0.5, g=0, so c_pad and
    # h_pad stay exactly 0 and padded W_lin columns contribute nothing.
    wih_p = jnp.pad(wih_g, ((0, 0), (0, 0), (0, pad)))                 # (4, I, Hp)
    whh_p = jnp.pad(whh_g, ((0, 0), (0, pad), (0, pad)))               # (4, Hp, Hp)
    b_p = jnp.pad(b_g, ((0, 0), (0, pad)))                             # (4, Hp)

    wih = jnp.transpose(wih_p, (1, 0, 2)).reshape(I, 4 * Hp)           # (I, 4*Hp)
    whh = jnp.transpose(whh_p, (1, 0, 2)).reshape(Hp, 4 * Hp)          # (Hp, 4*Hp)
    b = b_p.reshape(1, 4 * Hp)                                         # (1, 4*Hp)

    wlin = jnp.pad(w_lin, ((0, 0), (0, pad)))                          # (O, Hp)
    if O != 1:
        wlin = wlin.T                                                  # (Hp, O) dot path
    blin = b_lin.reshape(1, O)

    _assert_pad_zero(wih, whh, b, wlin, H, Hp, O)
    return dict(wih=wih, whh=whh, b=b, wlin=wlin, blin=blin, raw=raw)


def reference_forward(x, params):
    """Pure-JAX reference on the original (unpadded, PyTorch-layout) parameters."""
    raw = params["raw"]
    B, T, _ = x.shape
    H = raw["w_hh"].shape[1]
    Wi = raw["w_ih"].reshape(4, H, -1)
    Wh = raw["w_hh"].reshape(4, H, H)
    bi = raw["b_ih"].reshape(4, H)
    bh = raw["b_hh"].reshape(4, H)
    h = jnp.zeros((B, H), jnp.float32)
    c = jnp.zeros((B, H), jnp.float32)
    for t in range(T):
        xt = x[:, t, :]
        gate = lambda kk: xt @ Wi[kk].T + h @ Wh[kk].T + bi[kk] + bh[kk]
        i = jax.nn.sigmoid(gate(0))
        f = jax.nn.sigmoid(gate(1))
        g = jnp.tanh(gate(2))
        o = jax.nn.sigmoid(gate(3))
        c = f * c + i * g
        h = o * jnp.tanh(c)
    return h @ raw["w_lin"].T + raw["b_lin"][None, :]


if __name__ == "__main__":
    # batch=2, seq=8, input_size=1, hidden=50, output=1 (module defaults)
    B, T, I, H, O = 2, 8, 1, 50, 1
    key = jax.random.PRNGKey(0)
    kx, kp = jax.random.split(key)
    x = jax.random.normal(kx, (B, T, I), jnp.float32)
    params = init_params(kp, input_size=I, hidden_size=H, output_size=O)

    out = jax.block_until_ready(sp500_forward(x, params))
    ref = reference_forward(x, params)
    assert out.shape == (B, O)
    assert jnp.allclose(out, ref, atol=1e-3, rtol=1e-3), (out, ref)
    # TODO(synk): SP500Predictor.predict()'s sklearn scaler transform/inverse_transform
    # is host-side preprocessing and is intentionally not reproduced here.
    print("KERNEL_OK")
</pallas_src>

<mosaic_0001>
module attributes {stable_mosaic.version = 11 : i64} {
  func.func @lstm_linear_kernel(%arg0: memref<64x1xf32, #tpu.memory_space<vmem>>, %arg1: memref<1x512xf32, #tpu.memory_space<vmem>>, %arg2: memref<1x512xf32, #tpu.memory_space<vmem>>, %arg3: memref<128x512xf32, #tpu.memory_space<vmem>>, %arg4: memref<1x128xf32, #tpu.memory_space<vmem>>, %arg5: memref<1x1xf32, #tpu.memory_space<vmem>>, %arg6: memref<8x1xf32, #tpu.memory_space<vmem>>, %arg7: memref<64x512xf32, #tpu.memory_space<vmem>>) attributes {dimension_semantics = [], scalar_prefetch = 0 : i64, scratch_operands = 1 : i64, tpu.core_type = #tpu.core_type<tc>} {
    %c0 = arith.constant 0 : index
    %c0_0 = arith.constant 0 : index
    %0 = vector.load %arg0[%c0, %c0_0] : memref<64x1xf32, #tpu.memory_space<vmem>>, vector<64x1xf32>
    %c0_1 = arith.constant 0 : index
    %c0_2 = arith.constant 0 : index
    %1 = vector.load %arg1[%c0_1, %c0_2] : memref<1x512xf32, #tpu.memory_space<vmem>>, vector<1x512xf32>
    %2 = vector.broadcast %0 : vector<64x1xf32> to vector<64x512xf32>
    %3 = vector.broadcast %1 : vector<1x512xf32> to vector<64x512xf32>
    %4 = arith.mulf %2, %3 : vector<64x512xf32>
    %c0_3 = arith.constant 0 : index
    %c0_4 = arith.constant 0 : index
    %5 = vector.load %arg2[%c0_3, %c0_4] : memref<1x512xf32, #tpu.memory_space<vmem>>, vector<1x512xf32>
    %6 = vector.broadcast %5 : vector<1x512xf32> to vector<64x512xf32>
    %7 = arith.addf %4, %6 : vector<64x512xf32>
    %c0_5 = arith.constant 0 : index
    %c0_6 = arith.constant 0 : index
    %8 = vector.load %arg7[%c0_5, %c0_6] : memref<64x512xf32, #tpu.memory_space<vmem>>, vector<64x512xf32>
    tpu.vector_store %arg7[%c0_5, %c0_6], %7 {strides = array<i32>} : memref<64x512xf32, #tpu.memory_space<vmem>>, vector<64x512xf32>,
    %cst = arith.constant 0.000000e+00 : f32
    %9 = vector.broadcast %cst : f32 to vector<8x128xf32>
    %cst_7 = arith.constant 0.000000e+00 : f32
    %10 = vector.broadcast %cst_7 : f32 to vector<8x128xf32>
    %c0_8 = arith.constant 0 : index
    %c0_9 = arith.constant 0 : index
    %11 = vector.load %arg7[%c0_8, %c0_9] : memref<64x512xf32, #tpu.memory_space<vmem>>, vector<8x512xf32>
    %c0_10 = arith.constant 0 : index
    %c0_11 = arith.constant 0 : index
    %12 = vector.load %arg3[%c0_10, %c0_11] : memref<128x512xf32, #tpu.memory_space<vmem>>, vector<128x512xf32>
    %cst_12 = arith.constant dense<0.000000e+00> : vector<8x512xf32>
    %13 = tpu.matmul %9, %12, %cst_12 {dimension_numbers = #tpu.dot_dimension_numbers<[1], [0], [0], [1], [0, 0, 1, 1], [], []>} : vector<8x128xf32>, vector<128x512xf32>, vector<8x512xf32> -> vector<8x512xf32>
    %14 = arith.addf %11, %13 : vector<8x512xf32>
    %15 = vector.extract_strided_slice %14 {offsets = [0, 0], sizes = [8, 384], strides = [1, 1]} : vector<8x512xf32> to vector<8x384xf32>
    %16 = arith.negf %15 : vector<8x384xf32>
    %17 = math.exp %16 : vector<8x384xf32>
    %cst_13 = arith.constant 1.000000e+00 : f32
    %18 = vector.broadcast %cst_13 : f32 to vector<8x384xf32>
    %19 = arith.addf %18, %17 : vector<8x384xf32>
    %20 = arith.divf %18, %19 : vector<8x384xf32>
    %21 = vector.extract_strided_slice %20 {offsets = [0, 0], sizes = [8, 128], strides = [1, 1]} : vector<8x384xf32> to vector<8x128xf32>
    %22 = vector.extract_strided_slice %20 {offsets = [0, 128], sizes = [8, 128], strides = [1, 1]} : vector<8x384xf32> to vector<8x128xf32>
    %23 = vector.extract_strided_slice %20 {offsets = [0, 256], sizes = [8, 128], strides = [1, 1]} : vector<8x384xf32> to vector<8x128xf32>
    %24 = vector.extract_strided_slice %14 {offsets = [0, 384], sizes = [8, 128], strides = [1, 1]} : vector<8x512xf32> to vector<8x128xf32>
    %25 = math.tanh %24 : vector<8x128xf32>
    %26 = arith.mulf %22, %10 : vector<8x128xf32>
    %27 = arith.mulf %21, %25 : vector<8x128xf32>
    %28 = arith.addf %26, %27 : vector<8x128xf32>
    %29 = math.tanh %28 : vector<8x128xf32>
    %30 = arith.mulf %23, %29 : vector<8x128xf32>
    %c8 = arith.constant 8 : index
    %c0_14 = arith.constant 0 : index
    %31 = vector.load %arg7[%c8, %c0_14] : memref<64x512xf32, #tpu.memory_space<vmem>>, vector<8x512xf32>
    %c0_15 = arith.constant 0 : index
    %c0_16 = arith.constant 0 : index
    %32 = vector.load %arg3[%c0_15, %c0_16] : memref<128x512xf32, #tpu.memory_space<vmem>>, vector<128x512xf32>
    %cst_17 = arith.constant dense<0.000000e+00> : vector<8x512xf32>
    %33 = tpu.matmul %30, %32, %cst_17 {dimension_numbers = #tpu.dot_dimension_numbers<[1], [0], [0], [1], [0, 0, 1, 1], [], []>} : vector<8x128xf32>, vector<128x512xf32>, vector<8x512xf32> -> vector<8x512xf32>
    %34 = arith.addf %31, %33 : vector<8x512xf32>
    %35 = vector.extract_strided_slice %34 {offsets = [0, 0], sizes = [8, 384], strides = [1, 1]} : vector<8x512xf32> to vector<8x384xf32>
    %36 = arith.negf %35 : vector<8x384xf32>
    %37 = math.exp %36 : vector<8x384xf32>
    %cst_18 = arith.constant 1.000000e+00 : f32
    %38 = vector.broadcast %cst_18 : f32 to vector<8x384xf32>
    %39 = arith.addf %38, %37 : vector<8x384xf32>
    %40 = arith.divf %38, %39 : vector<8x384xf32>
    %41 = vector.extract_strided_slice %40 {offsets = [0, 0], sizes = [8, 128], strides = [1, 1]} : vector<8x384xf32> to vector<8x128xf32>
    %42 = vector.extract_strided_slice %40 {offsets = [0, 128], sizes = [8, 128], strides = [1, 1]} : vector<8x384xf32> to vector<8x128xf32>
    %43 = vector.extract_strided_slice %40 {offsets = [0, 256], sizes = [8, 128], strides = [1, 1]} : vector<8x384xf32> to vector<8x128xf32>
    %44 = vector.extract_strided_slice %34 {offsets = [0, 384], sizes = [8, 128], strides = [1, 1]} : vector<8x512xf32> to vector<8x128xf32>
    %45 = math.tanh %44 : vector<8x128xf32>
    %46 = arith.mulf %42, %28 : vector<8x128xf32>
    %47 = arith.mulf %41, %45 : vector<8x128xf32>
    %48 = arith.addf %46, %47 : vector<8x128xf32>
    %49 = math.tanh %48 : vector<8x128xf32>
    %50 = arith.mulf %43, %49 : vector<8x128xf32>
    %c16 = arith.constant 16 : index
    %c0_19 = arith.constant 0 : index
    %51 = vector.load %arg7[%c16, %c0_19] : memref<64x512xf32, #tpu.memory_space<vmem>>, vector<8x512xf32>
    %c0_20 = arith.constant 0 : index
    %c0_21 = arith.constant 0 : index
    %52 = vector.load %arg3[%c0_20, %c0_21] : memref<128x512xf32, #tpu.memory_space<vmem>>, vector<128x512xf32>
    %cst_22 = arith.constant dense<0.000000e+00> : vector<8x512xf32>
    %53 = tpu.matmul %50, %52, %cst_22 {dimension_numbers = #tpu.dot_dimension_numbers<[1], [0], [0], [1], [0, 0, 1, 1], [], []>} : vector<8x128xf32>, vector<128x512xf32>, vector<8x512xf32> -> vector<8x512xf32>
    %54 = arith.addf %51, %53 : vector<8x512xf32>
    %55 = vector.extract_strided_slice %54 {offsets = [0, 0], sizes = [8, 384], strides = [1, 1]} : vector<8x512xf32> to vector<8x384xf32>
    %56 = arith.negf %55 : vector<8x384xf32>
    %57 = math.exp %56 : vector<8x384xf32>
    %cst_23 = arith.constant 1.000000e+00 : f32
    %58 = vector.broadcast %cst_23 : f32 to vector<8x384xf32>
    %59 = arith.addf %58, %57 : vector<8x384xf32>
    %60 = arith.divf %58, %59 : vector<8x384xf32>
    %61 = vector.extract_strided_slice %60 {offsets = [0, 0], sizes = [8, 128], strides = [1, 1]} : vector<8x384xf32> to vector<8x128xf32>
    %62 = vector.extract_strided_slice %60 {offsets = [0, 128], sizes = [8, 128], strides = [1, 1]} : vector<8x384xf32> to vector<8x128xf32>
    %63 = vector.extract_strided_slice %60 {offsets = [0, 256], sizes = [8, 128], strides = [1, 1]} : vector<8x384xf32> to vector<8x128xf32>
    %64 = vector.extract_strided_slice %54 {offsets = [0, 384], sizes = [8, 128], strides = [1, 1]} : vector<8x512xf32> to vector<8x128xf32>
    %65 = math.tanh %64 : vector<8x128xf32>
    %66 = arith.mulf %62, %48 : vector<8x128xf32>
    %67 = arith.mulf %61, %65 : vector<8x128xf32>
    %68 = arith.addf %66, %67 : vector<8x128xf32>
    %69 = math.tanh %68 : vector<8x128xf32>
    %70 = arith.mulf %63, %69 : vector<8x128xf32>
    %c24 = arith.constant 24 : index
    %c0_24 = arith.constant 0 : index
    %71 = vector.load %arg7[%c24, %c0_24] : memref<64x512xf32, #tpu.memory_space<vmem>>, vector<8x512xf32>
    %c0_25 = arith.constant 0 : index
    %c0_26 = arith.constant 0 : index
    %72 = vector.load %arg3[%c0_25, %c0_26] : memref<128x512xf32, #tpu.memory_space<vmem>>, vector<128x512xf32>
    %cst_27 = arith.constant dense<0.000000e+00> : vector<8x512xf32>
    %73 = tpu.matmul %70, %72, %cst_27 {dimension_numbers = #tpu.dot_dimension_numbers<[1], [0], [0], [1], [0, 0, 1, 1], [], []>} : vector<8x128xf32>, vector<128x512xf32>, vector<8x512xf32> -> vector<8x512xf32>
    %74 = arith.addf %71, %73 : vector<8x512xf32>
    %75 = vector.extract_strided_slice %74 {offsets = [0, 0], sizes = [8, 384], strides = [1, 1]} : vector<8x512xf32> to vector<8x384xf32>
    %76 = arith.negf %75 : vector<8x384xf32>
    %77 = math.exp %76 : vector<8x384xf32>
    %cst_28 = arith.constant 1.000000e+00 : f32
    %78 = vector.broadcast %cst_28 : f32 to vector<8x384xf32>
    %79 = arith.addf %78, %77 : vector<8x384xf32>
    %80 = arith.divf %78, %79 : vector<8x384xf32>
    %81 = vector.extract_strided_slice %80 {offsets = [0, 0], sizes = [8, 128], strides = [1, 1]} : vector<8x384xf32> to vector<8x128xf32>
    %82 = vector.extract_strided_slice %80 {offsets = [0, 128], sizes = [8, 128], strides = [1, 1]} : vector<8x384xf32> to vector<8x128xf32>
    %83 = vector.extract_strided_slice %80 {offsets = [0, 256], sizes = [8, 128], strides = [1, 1]} : vector<8x384xf32> to vector<8x128xf32>
    %84 = vector.extract_strided_slice %74 {offsets = [0, 384], sizes = [8, 128], strides = [1, 1]} : vector<8x512xf32> to vector<8x128xf32>
    %85 = math.tanh %84 : vector<8x128xf32>
    %86 = arith.mulf %82, %68 : vector<8x128xf32>
    %87 = arith.mulf %81, %85 : vector<8x128xf32>
    %88 = arith.addf %86, %87 : vector<8x128xf32>
    %89 = math.tanh %88 : vector<8x128xf32>
    %90 = arith.mulf %83, %89 : vector<8x128xf32>
    %c32 = arith.constant 32 : index
    %c0_29 = arith.constant 0 : index
    %91 = vector.load %arg7[%c32, %c0_29] : memref<64x512xf32, #tpu.memory_space<vmem>>, vector<8x512xf32>
    %c0_30 = arith.constant 0 : index
    %c0_31 = arith.constant 0 : index
    %92 = vector.load %arg3[%c0_30, %c0_31] : memref<128x512xf32, #tpu.memory_space<vmem>>, vector<128x512xf32>
    %cst_32 = arith.constant dense<0.000000e+00> : vector<8x512xf32>
    %93 = tpu.matmul %90, %92, %cst_32 {dimension_numbers = #tpu.dot_dimension_numbers<[1], [0], [0], [1], [0, 0, 1, 1], [], []>} : vector<8x128xf32>, vector<128x512xf32>, vector<8x512xf32> -> vector<8x512xf32>
    %94 = arith.addf %91, %93 : vector<8x512xf32>
    %95 = vector.extract_strided_slice %94 {offsets = [0, 0], sizes = [8, 384], strides = [1, 1]} : vector<8x512xf32> to vector<8x384xf32>
    %96 = arith.negf %95 : vector<8x384xf32>
    %97 = math.exp %96 : vector<8x384xf32>
    %cst_33 = arith.constant 1.000000e+00 : f32
    %98 = vector.broadcast %cst_33 : f32 to vector<8x384xf32>
    %99 = arith.addf %98, %97 : vector<8x384xf32>
    %100 = arith.divf %98, %99 : vector<8x384xf32>
    %101 = vector.extract_strided_slice %100 {offsets = [0, 0], sizes = [8, 128], strides = [1, 1]} : vector<8x384xf32> to vector<8x128xf32>
    %102 = vector.extract_strided_slice %100 {offsets = [0, 128], sizes = [8, 128], strides = [1, 1]} : vector<8x384xf32> to vector<8x128xf32>
    %103 = vector.extract_strided_slice %100 {offsets = [0, 256], sizes = [8, 128], strides = [1, 1]} : vector<8x384xf32> to vector<8x128xf32>
    %104 = vector.extract_strided_slice %94 {offsets = [0, 384], sizes = [8, 128], strides = [1, 1]} : vector<8x512xf32> to vector<8x128xf32>
    %105 = math.tanh %104 : vector<8x128xf32>
    %106 = arith.mulf %102, %88 : vector<8x128xf32>
    %107 = arith.mulf %101, %105 : vector<8x128xf32>
    %108 = arith.addf %106, %107 : vector<8x128xf32>
    %109 = math.tanh %108 : vector<8x128xf32>
    %110 = arith.mulf %103, %109 : vector<8x128xf32>
    %c40 = arith.constant 40 : index
    %c0_34 = arith.constant 0 : index
    %111 = vector.load %arg7[%c40, %c0_34] : memref<64x512xf32, #tpu.memory_space<vmem>>, vector<8x512xf32>
    %c0_35 = arith.constant 0 : index
    %c0_36 = arith.constant 0 : index
    %112 = vector.load %arg3[%c0_35, %c0_36] : memref<128x512xf32, #tpu.memory_space<vmem>>, vector<128x512xf32>
    %cst_37 = arith.constant dense<0.000000e+00> : vector<8x512xf32>
    %113 = tpu.matmul %110, %112, %cst_37 {dimension_numbers = #tpu.dot_dimension_numbers<[1], [0], [0], [1], [0, 0, 1, 1], [], []>} : vector<8x128xf32>, vector<128x512xf32>, vector<8x512xf32> -> vector<8x512xf32>
    %114 = arith.addf %111, %113 : vector<8x512xf32>
    %115 = vector.extract_strided_slice %114 {offsets = [0, 0], sizes = [8, 384], strides = [1, 1]} : vector<8x512xf32> to vector<8x384xf32>
    %116 = arith.negf %115 : vector<8x384xf32>
    %117 = math.exp %116 : vector<8x384xf32>
    %cst_38 = arith.constant 1.000000e+00 : f32
    %118 = vector.broadcast %cst_38 : f32 to vector<8x384xf32>
    %119 = arith.addf %118, %117 : vector<8x384xf32>
    %120 = arith.divf %118, %119 : vector<8x384xf32>
    %121 = vector.extract_strided_slice %120 {offsets = [0, 0], sizes = [8, 128], strides = [1, 1]} : vector<8x384xf32> to vector<8x128xf32>
    %122 = vector.extract_strided_slice %120 {offsets = [0, 128], sizes = [8, 128], strides = [1, 1]} : vector<8x384xf32> to vector<8x128xf32>
    %123 = vector.extract_strided_slice %120 {offsets = [0, 256], sizes = [8, 128], strides = [1, 1]} : vector<8x384xf32> to vector<8x128xf32>
    %124 = vector.extract_strided_slice %114 {offsets = [0, 384], sizes = [8, 128], strides = [1, 1]} : vector<8x512xf32> to vector<8x128xf32>
    %125 = math.tanh %124 : vector<8x128xf32>
    %126 = arith.mulf %122, %108 : vector<8x128xf32>
    %127 = arith.mulf %121, %125 : vector<8x128xf32>
    %128 = arith.addf %126, %127 : vector<8x128xf32>
    %129 = math.tanh %128 : vector<8x128xf32>
    %130 = arith.mulf %123, %129 : vector<8x128xf32>
    %c48 = arith.constant 48 : index
    %c0_39 = arith.constant 0 : index
    %131 = vector.load %arg7[%c48, %c0_39] : memref<64x512xf32, #tpu.memory_space<vmem>>, vector<8x512xf32>
    %c0_40 = arith.constant 0 : index
    %c0_41 = arith.constant 0 : index
    %132 = vector.load %arg3[%c0_40, %c0_41] : memref<128x512xf32, #tpu.memory_space<vmem>>, vector<128x512xf32>
    %cst_42 = arith.constant dense<0.000000e+00> : vector<8x512xf32>
    %133 = tpu.matmul %130, %132, %cst_42 {dimension_numbers = #tpu.dot_dimension_numbers<[1], [0], [0], [1], [0, 0, 1, 1], [], []>} : vector<8x128xf32>, vector<128x512xf32>, vector<8x512xf32> -> vector<8x512xf32>
    %134 = arith.addf %131, %133 : vector<8x512xf32>
    %135 = vector.extract_strided_slice %134 {offsets = [0, 0], sizes = [8, 384], strides = [1, 1]} : vector<8x512xf32> to vector<8x384xf32>
    %136 = arith.negf %135 : vector<8x384xf32>
    %137 = math.exp %136 : vector<8x384xf32>
    %cst_43 = arith.constant 1.000000e+00 : f32
    %138 = vector.broadcast %cst_43 : f32 to vector<8x384xf32>
    %139 = arith.addf %138, %137 : vector<8x384xf32>
    %140 = arith.divf %138, %139 : vector<8x384xf32>
    %141 = vector.extract_strided_slice %140 {offsets = [0, 0], sizes = [8, 128], strides = [1, 1]} : vector<8x384xf32> to vector<8x128xf32>
    %142 = vector.extract_strided_slice %140 {offsets = [0, 128], sizes = [8, 128], strides = [1, 1]} : vector<8x384xf32> to vector<8x128xf32>
    %143 = vector.extract_strided_slice %140 {offsets = [0, 256], sizes = [8, 128], strides = [1, 1]} : vector<8x384xf32> to vector<8x128xf32>
    %144 = vector.extract_strided_slice %134 {offsets = [0, 384], sizes = [8, 128], strides = [1, 1]} : vector<8x512xf32> to vector<8x128xf32>
    %145 = math.tanh %144 : vector<8x128xf32>
    %146 = arith.mulf %142, %128 : vector<8x128xf32>
    %147 = arith.mulf %141, %145 : vector<8x128xf32>
    %148 = arith.addf %146, %147 : vector<8x128xf32>
    %149 = math.tanh %148 : vector<8x128xf32>
    %150 = arith.mulf %143, %149 : vector<8x128xf32>
    %c56 = arith.constant 56 : index
    %c0_44 = arith.constant 0 : index
    %151 = vector.load %arg7[%c56, %c0_44] : memref<64x512xf32, #tpu.memory_space<vmem>>, vector<8x512xf32>
    %c0_45 = arith.constant 0 : index
    %c0_46 = arith.constant 0 : index
    %152 = vector.load %arg3[%c0_45, %c0_46] : memref<128x512xf32, #tpu.memory_space<vmem>>, vector<128x512xf32>
    %cst_47 = arith.constant dense<0.000000e+00> : vector<8x512xf32>
    %153 = tpu.matmul %150, %152, %cst_47 {dimension_numbers = #tpu.dot_dimension_numbers<[1], [0], [0], [1], [0, 0, 1, 1], [], []>} : vector<8x128xf32>, vector<128x512xf32>, vector<8x512xf32> -> vector<8x512xf32>
    %154 = arith.addf %151, %153 : vector<8x512xf32>
    %155 = vector.extract_strided_slice %154 {offsets = [0, 0], sizes = [8, 384], strides = [1, 1]} : vector<8x512xf32> to vector<8x384xf32>
    %156 = arith.negf %155 : vector<8x384xf32>
    %157 = math.exp %156 : vector<8x384xf32>
    %cst_48 = arith.constant 1.000000e+00 : f32
    %158 = vector.broadcast %cst_48 : f32 to vector<8x384xf32>
    %159 = arith.addf %158, %157 : vector<8x384xf32>
    %160 = arith.divf %158, %159 : vector<8x384xf32>
    %161 = vector.extract_strided_slice %160 {offsets = [0, 0], sizes = [8, 128], strides = [1, 1]} : vector<8x384xf32> to vector<8x128xf32>
    %162 = vector.extract_strided_slice %160 {offsets = [0, 128], sizes = [8, 128], strides = [1, 1]} : vector<8x384xf32> to vector<8x128xf32>
    %163 = vector.extract_strided_slice %160 {offsets = [0, 256], sizes = [8, 128], strides = [1, 1]} : vector<8x384xf32> to vector<8x128xf32>
    %164 = vector.extract_strided_slice %154 {offsets = [0, 384], sizes = [8, 128], strides = [1, 1]} : vector<8x512xf32> to vector<8x128xf32>
    %165 = math.tanh %164 : vector<8x128xf32>
    %166 = arith.mulf %162, %148 : vector<8x128xf32>
    %167 = arith.mulf %161, %165 : vector<8x128xf32>
    %168 = arith.addf %166, %167 : vector<8x128xf32>
    %169 = math.tanh %168 : vector<8x128xf32>
    %170 = arith.mulf %163, %169 : vector<8x128xf32>
    %c0_49 = arith.constant 0 : index
    %c0_50 = arith.constant 0 : index
    %171 = vector.load %arg4[%c0_49, %c0_50] : memref<1x128xf32, #tpu.memory_space<vmem>>, vector<1x128xf32>
    %172 = vector.broadcast %171 : vector<1x128xf32> to vector<8x128xf32>
    %173 = arith.mulf %170, %172 : vector<8x128xf32>
    %cst_51 = arith.constant dense<0.000000e+00> : vector<8xf32>
    %174 = vector.multi_reduction <add>, %173, %cst_51 [1] : vector<8x128xf32> to vector<8xf32>
    %175 = vector.shape_cast %174 : vector<8xf32> to vector<8x1xf32>
    %c0_52 = arith.constant 0 : index
    %c0_53 = arith.constant 0 : index
    %176 = vector.load %arg5[%c0_52, %c0_53] : memref<1x1xf32, #tpu.memory_space<vmem>>, vector<1x1xf32>
    %177 = vector.broadcast %176 : vector<1x1xf32> to vector<8x1xf32>
    %178 = arith.addf %175, %177 : vector<8x1xf32>
    %c0_54 = arith.constant 0 : index
    %c0_55 = arith.constant 0 : index
    %179 = vector.load %arg6[%c0_54, %c0_55] : memref<8x1xf32, #tpu.memory_space<vmem>>, vector<8x1xf32>
    tpu.vector_store %arg6[%c0_54, %c0_55], %178 {strides = array<i32>} : memref<8x1xf32, #tpu.memory_space<vmem>>, vector<8x1xf32>,
    return
  }
}

</mosaic_0001>

<llo_original>
// kernel: tpu_custom_call.1
$region0: #{tpu_custom_call.1}
  #allocation0 [shape = 'u32[]', space=smem, size = 0x4, offset = 0x4, fixed_abs, tag = 'smem constant byte address 0x4 - core index']
  #allocation1 [shape = 'u32[72,128]{1,0:T(1,128)}', space=vmem, size = 0x9000, scoped, tag = 'internal scratch']
  #allocation2 [shape = 'f32[64,512]{1,0:T(8,128)}', space=vmem, size = 0x20000, scoped, tag = 'scratch operand']
  #allocation3 [shape = 'f32[1,1]{1,0:T(1,128)S(1)}', space=vmem, size = 0x200, scoped, tag = 'scoped memory for tpu_custom_call.1']
  %s0 = inlined_call_operand.vmem [shape: f32[64,1], index: 0, kind: input, shape index: {}]
  %s1 = inlined_call_operand.vmem [shape: f32[1,512], index: 1, kind: input, shape index: {}]
  %s2 = inlined_call_operand.vmem [shape: f32[1,512], index: 2, kind: input, shape index: {}]
  %s3 = inlined_call_operand.hbm [shape: f32[128,512], index: 3, kind: input, shape index: {}]
  %s4 = inlined_call_operand.vmem [shape: f32[1,128], index: 4, kind: input, shape index: {}]
  %s5 = inlined_call_operand.<no memory space> [shape: f32[1,1], index: 5, kind: input, shape index: {}]
  %s6 = inlined_call_operand.vmem [shape: f32[8,1], index: 6, kind: output, shape index: {}]
  %s7 = sld [smem:[#allocation0]]
  $region38: #{tpu_custom_call.1} parent=0
    _
  %s9 = ssub.s32 1, %s7
  %s10 = scalar_select 0, %s9, %s7
  %v11 = vstv %s5
  %12 = vst [vmem:[#allocation3] sm:$0x1] %v11
  $region1: #{tpu_custom_call.1} parent=0
    #allocation4 [shape = 'u8[262144]{0}', space=vmem, size = 0x40000, scoped, tag = 'input window, operand 3, single buffered']
    #allocation5 [shape = 's32[1]{0}', space=sflag, size = 0x4, scoped, tag = 'scoped memory for tpu_custom_call.1']
    %13 = vsyncpa [#allocation5], 0
    // Predicated region
    $region2: #{tpu_custom_call.1} parent=1 // pred_check
      _
    $region3: #{tpu_custom_call.1} parent=1 // pred_check_branch
      %15 = sbr.rel (0) target = $region5
    $region4: #{tpu_custom_call.1} parent=1 // pred_region
      _
    $region5: #{tpu_custom_call.1} parent=1 // pred_fallthru
      _
    // Predicated region
    $region6: #{tpu_custom_call.1} parent=1 // pred_check
      _
    $region7: #{tpu_custom_call.1} parent=1 // pred_check_branch
      %17 = sbr.rel (0) target = $region9
    $region8: #{tpu_custom_call.1} parent=1 // pred_region
      _
    $region9: #{tpu_custom_call.1} parent=1 // pred_fallthru
      _
    // Predicated region
    $region10: #{tpu_custom_call.1} parent=1 // pred_check
      _
    $region11: #{tpu_custom_call.1} parent=1 // pred_check_branch
      %19 = sbr.rel (0) target = $region13
    $region12: #{tpu_custom_call.1} parent=1 // pred_region
      _
    $region13: #{tpu_custom_call.1} parent=1 // pred_fallthru
      _
    // Predicated region
    $region14: #{tpu_custom_call.1} parent=1 // pred_check
      _
    $region15: #{tpu_custom_call.1} parent=1 // pred_check_branch
      %21 = sbr.rel (0) target = $region17
    $region16: #{tpu_custom_call.1} parent=1 // pred_region
      %23 = vsyncadd [#allocation5], 0
      %s24 = sshll.u32 %s3, 4
      %s25 = int_to_ptr.hbm [resolvable:$true] %s24
      %s26 = sshll.u32 [#allocation4], 4
      %s27 = int_to_ptr.vmem [resolvable:$true] %s26
      %32 = dma.hbm_to_vmem [thread:$0]  %s25, 8192, %s27, [#allocation5], 512, 512, 32
    $region17: #{tpu_custom_call.1} parent=1 // pred_fallthru
      _
    // Predicated region
    $region18: #{tpu_custom_call.1} parent=1 // pred_check
      _
    $region19: #{tpu_custom_call.1} parent=1 // pred_check_branch
      %34 = sbr.rel (0) target = $region21
    $region20: #{tpu_custom_call.1} parent=1 // pred_region
      _
    $region21: #{tpu_custom_call.1} parent=1 // pred_fallthru
      _
    // Predicated region
    $region22: #{tpu_custom_call.1} parent=1 // pred_check
      _
    $region23: #{tpu_custom_call.1} parent=1 // pred_check_branch
      %36 = sbr.rel (0) target = $region25
    $region24: #{tpu_custom_call.1} parent=1 // pred_region
      _
    $region25: #{tpu_custom_call.1} parent=1 // pred_fallthru
      _
    // Predicated region
    $region26: #{tpu_custom_call.1} parent=1 // pred_check
      _
    $region27: #{tpu_custom_call.1} parent=1 // pred_check_branch
      %38 = sbr.rel (0) target = $region29
    $region28: #{tpu_custom_call.1} parent=1 // pred_region
      %40 = dma.done [#allocation5], 8192
    $region29: #{tpu_custom_call.1} parent=1 // pred_fallthru
      _
    %v41 = vld [vmem:[%s0] sm:$0xff]
    %v42 = vld [vmem:[%s0 + $0x8] sm:$0xff]
    %v43 = vld [vmem:[%s0 + $0x10] sm:$0xff]
    %v44 = vld [vmem:[%s0 + $0x18] sm:$0xff]
    %v45 = vld [vmem:[%s0 + $0x20] sm:$0xff]
    %v46 = vld [vmem:[%s0 + $0x28] sm:$0xff]
    %v47 = vld [vmem:[%s0 + $0x30] sm:$0xff]
    %v48 = vld [vmem:[%s0 + $0x38] sm:$0xff]
    %v49 = vld [vmem:[%s1] sm:$0xf]
    %51 = vset.pattern.permute.xlu0 0
    %52 = vperm.xlu0 %51, %v41
    %v53 = vpop.permute.xlu0 %52
    %56 = vset.pattern.permute.xlu0 0
    %57 = vperm.xlu0 %56, %v42
    %v58 = vpop.permute.xlu0 %57
    %61 = vset.pattern.permute.xlu0 0
    %62 = vperm.xlu0 %61, %v43
    %v63 = vpop.permute.xlu0 %62
    %66 = vset.pattern.permute.xlu0 0
    %67 = vperm.xlu0 %66, %v44
    %v68 = vpop.permute.xlu0 %67
    %71 = vset.pattern.permute.xlu0 0
    %72 = vperm.xlu0 %71, %v45
    %v73 = vpop.permute.xlu0 %72
    %76 = vset.pattern.permute.xlu0 0
    %77 = vperm.xlu0 %76, %v46
    %v78 = vpop.permute.xlu0 %77
    %81 = vset.pattern.permute.xlu0 0
    %82 = vperm.xlu0 %81, %v47
    %v83 = vpop.permute.xlu0 %82
    %86 = vset.pattern.permute.xlu0 0
    %87 = vperm.xlu0 %86, %v48
    %v88 = vpop.permute.xlu0 %87
    %v91 = vperm.slane %v49, 0
    %v92 = vperm.slane %v49, 1
    %v93 = vperm.slane %v49, 2
    %v94 = vperm.slane %v49, 3
    %v99 = vmul.f32 %v53, %v91
    %v100 = vmul.f32 %v53, %v92
    %v101 = vmul.f32 %v53, %v93
    %v102 = vmul.f32 %v53, %v94
    %v103 = vmul.f32 %v58, %v91
    %v104 = vmul.f32 %v58, %v92
    %v105 = vmul.f32 %v58, %v93
    %v106 = vmul.f32 %v58, %v94
    %v107 = vmul.f32 %v63, %v91
    %v108 = vmul.f32 %v63, %v92
    %v109 = vmul.f32 %v63, %v93
    %v110 = vmul.f32 %v63, %v94
    %v111 = vmul.f32 %v68, %v91
    %v112 = vmul.f32 %v68, %v92
    %v113 = vmul.f32 %v68, %v93
    %v114 = vmul.f32 %v68, %v94
    %v115 = vmul.f32 %v73, %v91
    %v116 = vmul.f32 %v73, %v92
    %v117 = vmul.f32 %v73, %v93
    %v118 = vmul.f32 %v73, %v94
    %v119 = vmul.f32 %v78, %v91
    %v120 = vmul.f32 %v78, %v92
    %v121 = vmul.f32 %v78, %v93
    %v122 = vmul.f32 %v78, %v94
    %v123 = vmul.f32 %v83, %v91
    %v124 = vmul.f32 %v83, %v92
    %v125 = vmul.f32 %v83, %v93
    %v126 = vmul.f32 %v83, %v94
    %v127 = vmul.f32 %v88, %v91
    %v128 = vmul.f32 %v88, %v92
    %v129 = vmul.f32 %v88, %v93
    %v130 = vmul.f32 %v88, %v94
    %v131 = vld [vmem:[%s2] sm:$0xf]
    %v133 = vperm.slane %v131, 0
    %v134 = vperm.slane %v131, 1
    %v135 = vperm.slane %v131, 2
    %v136 = vperm.slane %v131, 3
    %v141 = vadd.f32 %v99, %v133
    %v142 = vadd.f32 %v100, %v134
    %v143 = vadd.f32 %v101, %v135
    %v144 = vadd.f32 %v102, %v136
    %v145 = vadd.f32 %v103, %v133
    %v146 = vadd.f32 %v104, %v134
    %v147 = vadd.f32 %v105, %v135
    %v148 = vadd.f32 %v106, %v136
    %v149 = vadd.f32 %v107, %v133
    %v150 = vadd.f32 %v108, %v134
    %v151 = vadd.f32 %v109, %v135
    %v152 = vadd.f32 %v110, %v136
    %v153 = vadd.f32 %v111, %v133
    %v154 = vadd.f32 %v112, %v134
    %v155 = vadd.f32 %v113, %v135
    %v156 = vadd.f32 %v114, %v136
    %v157 = vadd.f32 %v115, %v133
    %v158 = vadd.f32 %v116, %v134
    %v159 = vadd.f32 %v117, %v135
    %v160 = vadd.f32 %v118, %v136
    %v161 = vadd.f32 %v119, %v133
    %v162 = vadd.f32 %v120, %v134
    %v163 = vadd.f32 %v121, %v135
    %v164 = vadd.f32 %v122, %v136
    %v165 = vadd.f32 %v123, %v133
    %v166 = vadd.f32 %v124, %v134
    %v167 = vadd.f32 %v125, %v135
    %v168 = vadd.f32 %v126, %v136
    %v169 = vadd.f32 %v127, %v133
    %v170 = vadd.f32 %v128, %v134
    %v171 = vadd.f32 %v129, %v135
    %v172 = vadd.f32 %v130, %v136
    %173 = vst [vmem:[#allocation2] sm:$0xff] %v141
    %174 = vst [vmem:[#allocation2 + $0x8] sm:$0xff] %v142
    %175 = vst [vmem:[#allocation2 + $0x10] sm:$0xff] %v143
    %176 = vst [vmem:[#allocation2 + $0x18] sm:$0xff] %v144
    %177 = vst [vmem:[#allocation2 + $0x20] sm:$0xff] %v145
    %178 = vst [vmem:[#allocation2 + $0x28] sm:$0xff] %v146
    %179 = vst [vmem:[#allocation2 + $0x30] sm:$0xff] %v147
    %180 = vst [vmem:[#allocation2 + $0x38] sm:$0xff] %v148
    %181 = vst [vmem:[#allocation2 + $0x40] sm:$0xff] %v149
    %182 = vst [vmem:[#allocation2 + $0x48] sm:$0xff] %v150
    %183 = vst [vmem:[#allocation2 + $0x50] sm:$0xff] %v151
    %184 = vst [vmem:[#allocation2 + $0x58] sm:$0xff] %v152
    %185 = vst [vmem:[#allocation2 + $0x60] sm:$0xff] %v153
    %186 = vst [vmem:[#allocation2 + $0x68] sm:$0xff] %v154
    %187 = vst [vmem:[#allocation2 + $0x70] sm:$0xff] %v155
    %188 = vst [vmem:[#allocation2 + $0x78] sm:$0xff] %v156
    %189 = vst [vmem:[#allocation2 + $0x80] sm:$0xff] %v157
    %190 = vst [vmem:[#allocation2 + $0x88] sm:$0xff] %v158
    %191 = vst [vmem:[#allocation2 + $0x90] sm:$0xff] %v159
    %192 = vst [vmem:[#allocation2 + $0x98] sm:$0xff] %v160
    %193 = vst [vmem:[#allocation2 + $0xa0] sm:$0xff] %v161
    %194 = vst [vmem:[#allocation2 + $0xa8] sm:$0xff] %v162
    %195 = vst [vmem:[#allocation2 + $0xb0] sm:$0xff] %v163
    %196 = vst [vmem:[#allocation2 + $0xb8] sm:$0xff] %v164
    %197 = vst [vmem:[#allocation2 + $0xc0] sm:$0xff] %v165
    %198 = vst [vmem:[#allocation2 + $0xc8] sm:$0xff] %v166
    %199 = vst [vmem:[#allocation2 + $0xd0] sm:$0xff] %v167
    %200 = vst [vmem:[#allocation2 + $0xd8] sm:$0xff] %v168
    %201 = vst [vmem:[#allocation2 + $0xe0] sm:$0xff] %v169
    %202 = vst [vmem:[#allocation2 + $0xe8] sm:$0xff] %v170
    %203 = vst [vmem:[#allocation2 + $0xf0] sm:$0xff] %v171
    %204 = vst [vmem:[#allocation2 + $0xf8] sm:$0xff] %v172
    %v205 = vld [vmem:[#allocation2] sm:$0xff]
    %v206 = vld [vmem:[#allocation2 + $0x8] sm:$0xff]
    %v207 = vld [vmem:[#allocation2 + $0x10] sm:$0xff]
    %v208 = vld [vmem:[#allocation2 + $0x18] sm:$0xff]
    %v209 = vld [vmem:[#allocation4] sm:$0xff]
    %v210 = vld [vmem:[#allocation4 + $0x8] sm:$0xff]
    %v211 = vld [vmem:[#allocation4 + $0x10] sm:$0xff]
    %v212 = vld [vmem:[#allocation4 + $0x18] sm:$0xff]
    %v213 = vld [vmem:[#allocation4 + $0x20] sm:$0xff]
    %v214 = vld [vmem:[#allocation4 + $0x28] sm:$0xff]
    %v215 = vld [vmem:[#allocation4 + $0x30] sm:$0xff]
    %v216 = vld [vmem:[#allocation4 + $0x38] sm:$0xff]
    %v217 = vld [vmem:[#allocation4 + $0x40] sm:$0xff]
    %v218 = vld [vmem:[#allocation4 + $0x48] sm:$0xff]
    %v219 = vld [vmem:[#allocation4 + $0x50] sm:$0xff]
    %v220 = vld [vmem:[#allocation4 + $0x58] sm:$0xff]
    %v221 = vld [vmem:[#allocation4 + $0x60] sm:$0xff]
    %v222 = vld [vmem:[#allocation4 + $0x68] sm:$0xff]
    %v223 = vld [vmem:[#allocation4 + $0x70] sm:$0xff]
    %v224 = vld [vmem:[#allocation4 + $0x78] sm:$0xff]
    %v225 = vld [vmem:[#allocation4 + $0x80] sm:$0xff]
    %v226 = vld [vmem:[#allocation4 + $0x88] sm:$0xff]
    %v227 = vld [vmem:[#allocation4 + $0x90] sm:$0xff]
    %v228 = vld [vmem:[#allocation4 + $0x98] sm:$0xff]
    %v229 = vld [vmem:[#allocation4 + $0xa0] sm:$0xff]
    %v230 = vld [vmem:[#allocation4 + $0xa8] sm:$0xff]
    %v231 = vld [vmem:[#allocation4 + $0xb0] sm:$0xff]
    %v232 = vld [vmem:[#allocation4 + $0xb8] sm:$0xff]
    %v233 = vld [vmem:[#allocation4 + $0xc0] sm:$0xff]
    %v234 = vld [vmem:[#allocation4 + $0xc8] sm:$0xff]
    %v235 = vld [vmem:[#allocation4 + $0xd0] sm:$0xff]
    %v236 = vld [vmem:[#allocation4 + $0xd8] sm:$0xff]
    %v237 = vld [vmem:[#allocation4 + $0xe0] sm:$0xff]
    %v238 = vld [vmem:[#allocation4 + $0xe8] sm:$0xff]
    %v239 = vld [vmem:[#allocation4 + $0xf0] sm:$0xff]
    %v240 = vld [vmem:[#allocation4 + $0xf8] sm:$0xff]
    %v241 = vld [vmem:[#allocation4 + $0x100] sm:$0xff]
    %v242 = vld [vmem:[#allocation4 + $0x108] sm:$0xff]
    %v243 = vld [vmem:[#allocation4 + $0x110] sm:$0xff]
    %v244 = vld [vmem:[#allocation4 + $0x118] sm:$0xff]
    %v245 = vld [vmem:[#allocation4 + $0x120] sm:$0xff]
    %v246 = vld [vmem:[#allocation4 + $0x128] sm:$0xff]
    %v247 = vld [vmem:[#allocation4 + $0x130] sm:$0xff]
    %v248 = vld [vmem:[#allocation4 + $0x138] sm:$0xff]
    %v249 = vld [vmem:[#allocation4 + $0x140] sm:$0xff]
    %v250 = vld [vmem:[#allocation4 + $0x148] sm:$0xff]
    %v251 = vld [vmem:[#allocation4 + $0x150] sm:$0xff]
    %v252 = vld [vmem:[#allocation4 + $0x158] sm:$0xff]
    %v253 = vld [vmem:[#allocation4 + $0x160] sm:$0xff]
    %v254 = vld [vmem:[#allocation4 + $0x168] sm:$0xff]
    %v255 = vld [vmem:[#allocation4 + $0x170] sm:$0xff]
    %v256 = vld [vmem:[#allocation4 + $0x178] sm:$0xff]
    %v257 = vld [vmem:[#allocation4 + $0x180] sm:$0xff]
    %v258 = vld [vmem:[#allocation4 + $0x188] sm:$0xff]
    %v259 = vld [vmem:[#allocation4 + $0x190] sm:$0xff]
    %v260 = vld [vmem:[#allocation4 + $0x198] sm:$0xff]
    %v261 = vld [vmem:[#allocation4 + $0x1a0] sm:$0xff]
    %v262 = vld [vmem:[#allocation4 + $0x1a8] sm:$0xff]
    %v263 = vld [vmem:[#allocation4 + $0x1b0] sm:$0xff]
    %v264 = vld [vmem:[#allocation4 + $0x1b8] sm:$0xff]
    %v265 = vld [vmem:[#allocation4 + $0x1c0] sm:$0xff]
    %v266 = vld [vmem:[#allocation4 + $0x1c8] sm:$0xff]
    %v267 = vld [vmem:[#allocation4 + $0x1d0] sm:$0xff]
    %v268 = vld [vmem:[#allocation4 + $0x1d8] sm:$0xff]
    %v269 = vld [vmem:[#allocation4 + $0x1e0] sm:$0xff]
    %v270 = vld [vmem:[#allocation4 + $0x1e8] sm:$0xff]
    %v271 = vld [vmem:[#allocation4 + $0x1f0] sm:$0xff]
    %v272 = vld [vmem:[#allocation4 + $0x1f8] sm:$0xff]
    %273 = vmatpush.msra.mxu0 %v269
    %274 = vmatpush.msra.mxu0 %v265
    %275 = vmatpush.msra.mxu0 %v261
    %276 = vmatpush.msra.mxu0 %v257
    %277 = vmatpush.msra.mxu0 %v253
    %278 = vmatpush.msra.mxu0 %v249
    %279 = vmatpush.msra.mxu0 %v245
    %280 = vmatpush.msra.mxu0 %v241
    %281 = vmatpush.msra.mxu0 %v237
    %282 = vmatpush.msra.mxu0 %v233
    %283 = vmatpush.msra.mxu0 %v229
    %284 = vmatpush.msra.mxu0 %v225
    %285 = vmatpush.msra.mxu0 %v221
    %286 = vmatpush.msra.mxu0 %v217
    %287 = vmatpush.msra.mxu0 %v213
    %288 = vmatpush.msra.mxu0 %v209
    %289 = vmatmul.f32.gmra.mxu0 0.0
    %v290 = vpop.f32.mrf.mxu0
    %v291 = vadd.f32 0.0, %v290
    %292 = vdwg.mxu0
    %293 = vmatpush.msra.mxu0 %v270
    %294 = vmatpush.msra.mxu0 %v266
    %295 = vmatpush.msra.mxu0 %v262
    %296 = vmatpush.msra.mxu0 %v258
    %297 = vmatpush.msra.mxu0 %v254
    %298 = vmatpush.msra.mxu0 %v250
    %299 = vmatpush.msra.mxu0 %v246
    %300 = vmatpush.msra.mxu0 %v242
    %301 = vmatpush.msra.mxu0 %v238
    %302 = vmatpush.msra.mxu0 %v234
    %303 = vmatpush.msra.mxu0 %v230
    %304 = vmatpush.msra.mxu0 %v226
    %305 = vmatpush.msra.mxu0 %v222
    %306 = vmatpush.msra.mxu0 %v218
    %307 = vmatpush.msra.mxu0 %v214
    %308 = vmatpush.msra.mxu0 %v210
    %309 = vmatmul.f32.gmra.mxu0 0.0
    %v310 = vpop.f32.mrf.mxu0
    %v311 = vadd.f32 0.0, %v310
    %312 = vdwg.mxu0
    %313 = vmatpush.msra.mxu0 %v271
    %314 = vmatpush.msra.mxu0 %v267
    %315 = vmatpush.msra.mxu0 %v263
    %316 = vmatpush.msra.mxu0 %v259
    %317 = vmatpush.msra.mxu0 %v255
    %318 = vmatpush.msra.mxu0 %v251
    %319 = vmatpush.msra.mxu0 %v247
    %320 = vmatpush.msra.mxu0 %v243
    %321 = vmatpush.msra.mxu0 %v239
    %322 = vmatpush.msra.mxu0 %v235
    %323 = vmatpush.msra.mxu0 %v231
    %324 = vmatpush.msra.mxu0 %v227
    %325 = vmatpush.msra.mxu0 %v223
    %326 = vmatpush.msra.mxu0 %v219
    %327 = vmatpush.msra.mxu0 %v215
    %328 = vmatpush.msra.mxu0 %v211
    %329 = vmatmul.f32.gmra.mxu0 0.0
    %v330 = vpop.f32.mrf.mxu0
    %v331 = vadd.f32 0.0, %v330
    %332 = vdwg.mxu0
    %333 = vmatpush.msra.mxu0 %v272
    %334 = vmatpush.msra.mxu0 %v268
    %335 = vmatpush.msra.mxu0 %v264
    %336 = vmatpush.msra.mxu0 %v260
    %337 = vmatpush.msra.mxu0 %v256
    %338 = vmatpush.msra.mxu0 %v252
    %339 = vmatpush.msra.mxu0 %v248
    %340 = vmatpush.msra.mxu0 %v244
    %341 = vmatpush.msra.mxu0 %v240
    %342 = vmatpush.msra.mxu0 %v236
    %343 = vmatpush.msra.mxu0 %v232
    %344 = vmatpush.msra.mxu0 %v228
    %345 = vmatpush.msra.mxu0 %v224
    %346 = vmatpush.msra.mxu0 %v220
    %347 = vmatpush.msra.mxu0 %v216
    %348 = vmatpush.msra.mxu0 %v212
    %349 = vmatmul.f32.gmra.mxu0 0.0
    %v350 = vpop.f32.mrf.mxu0
    %v351 = vadd.f32 0.0, %v350
    %352 = vdwg.mxu0
    %v353 = vadd.f32 %v205, %v291
    %v354 = vadd.f32 %v206, %v311
    %v355 = vadd.f32 %v207, %v331
    %v356 = vadd.f32 %v208, %v351
    %v357 = vxor.u32 %v353, 2147483648
    %v358 = vxor.u32 %v354, 2147483648
    %v359 = vxor.u32 %v355, 2147483648
    %v360 = vmul.f32 %v357, 1.442695
    %v361 = vpow.pop %v360
    %v362 = vmul.f32 %v358, 1.442695
    %v363 = vpow.pop %v362
    %v364 = vmul.f32 %v359, 1.442695
    %v365 = vpow.pop %v364
    %v366 = vadd.f32 %v361, 1.0
    %v367 = vadd.f32 %v363, 1.0
    %v368 = vadd.f32 %v365, 1.0
    %v369 = vrcp.pop %v366
    %v370 = vmul.f32 %v366, %v369
    %v371 = vsub.f32 1.0, %v370
    %v372 = vmul.f32 %v369, %v371
    %v373 = vadd.f32 %v369, %v372
    %vm374 = vweird.f32 %v366
    %vm375 = vweird.f32 %v369
    %vm376 = vmor %vm374, %vm375
    %v377 = vsel %vm376, %v369, %v373
    %v378 = vand.u32 2147483647, %v366
    %vm379 = vcmp.eq.f32.partialorder %v378, 8.507059e+37
    %v380 = vand.u32 %v366, 2147483648
    %v381 = vor.u32 1.1754944e-38, %v380
    %v382 = vsel %vm379, %v381, %v377
    %v383 = vmul.f32 1.0, %v382
    %v384 = vrcp.pop %v367
    %v385 = vmul.f32 %v367, %v384
    %v386 = vsub.f32 1.0, %v385
    %v387 = vmul.f32 %v384, %v386
    %v388 = vadd.f32 %v384, %v387
    %vm389 = vweird.f32 %v367
    %vm390 = vweird.f32 %v384
    %vm391 = vmor %vm389, %vm390
    %v392 = vsel %vm391, %v384, %v388
    %v393 = vand.u32 2147483647, %v367
    %vm394 = vcmp.eq.f32.partialorder %v393, 8.507059e+37
    %v395 = vand.u32 %v367, 2147483648
    %v396 = vor.u32 1.1754944e-38, %v395
    %v397 = vsel %vm394, %v396, %v392
    %v398 = vmul.f32 1.0, %v397
    %v399 = vrcp.pop %v368
    %v400 = vmul.f32 %v368, %v399
    %v401 = vsub.f32 1.0, %v400
    %v402 = vmul.f32 %v399, %v401
    %v403 = vadd.f32 %v399, %v402
    %vm404 = vweird.f32 %v368
    %vm405 = vweird.f32 %v399
    %vm406 = vmor %vm404, %vm405
    %v407 = vsel %vm406, %v399, %v403
    %v408 = vand.u32 2147483647, %v368
    %vm409 = vcmp.eq.f32.partialorder %v408, 8.507059e+37
    %v410 = vand.u32 %v368, 2147483648
    %v411 = vor.u32 1.1754944e-38, %v410
    %v412 = vsel %vm409, %v411, %v407
    %v413 = vmul.f32 1.0, %v412
    %v414 = vtanh.pop %v356
    %v415 = vmul.f32 %v398, 0.0
    %v416 = vmul.f32 %v383, %v414
    %v417 = vadd.f32 %v415, %v416
    %v418 = vtanh.pop %v417
    %v419 = vmul.f32 %v413, %v418
    %v420 = vld [vmem:[#allocation2 + $0x20] sm:$0xff]
    %v421 = vld [vmem:[#allocation2 + $0x28] sm:$0xff]
    %v422 = vld [vmem:[#allocation2 + $0x30] sm:$0xff]
    %v423 = vld [vmem:[#allocation2 + $0x38] sm:$0xff]
    %424 = vmatpush.msra.mxu0 %v269
    %425 = vmatpush.msra.mxu0 %v265
    %426 = vmatpush.msra.mxu0 %v261
    %427 = vmatpush.msra.mxu0 %v257
    %428 = vmatpush.msra.mxu0 %v253
    %429 = vmatpush.msra.mxu0 %v249
    %430 = vmatpush.msra.mxu0 %v245
    %431 = vmatpush.msra.mxu0 %v241
    %432 = vmatpush.msra.mxu0 %v237
    %433 = vmatpush.msra.mxu0 %v233
    %434 = vmatpush.msra.mxu0 %v229
    %435 = vmatpush.msra.mxu0 %v225
    %436 = vmatpush.msra.mxu0 %v221
    %437 = vmatpush.msra.mxu0 %v217
    %438 = vmatpush.msra.mxu0 %v213
    %439 = vmatpush.msra.mxu0 %v209
    %440 = vmatmul.f32.gmra.mxu0 %v419
    %v441 = vpop.f32.mrf.mxu0
    %v442 = vadd.f32 0.0, %v441
    %443 = vdwg.mxu0
    %444 = vmatpush.msra.mxu0 %v270
    %445 = vmatpush.msra.mxu0 %v266
    %446 = vmatpush.msra.mxu0 %v262
    %447 = vmatpush.msra.mxu0 %v258
    %448 = vmatpush.msra.mxu0 %v254
    %449 = vmatpush.msra.mxu0 %v250
    %450 = vmatpush.msra.mxu0 %v246
    %451 = vmatpush.msra.mxu0 %v242
    %452 = vmatpush.msra.mxu0 %v238
    %453 = vmatpush.msra.mxu0 %v234
    %454 = vmatpush.msra.mxu0 %v230
    %455 = vmatpush.msra.mxu0 %v226
    %456 = vmatpush.msra.mxu0 %v222
    %457 = vmatpush.msra.mxu0 %v218
    %458 = vmatpush.msra.mxu0 %v214
    %459 = vmatpush.msra.mxu0 %v210
    %460 = vmatmul.f32.gmra.mxu0 %v419
    %v461 = vpop.f32.mrf.mxu0
    %v462 = vadd.f32 0.0, %v461
    %463 = vdwg.mxu0
    %464 = vmatpush.msra.mxu0 %v271
    %465 = vmatpush.msra.mxu0 %v267
    %466 = vmatpush.msra.mxu0 %v263
    %467 = vmatpush.msra.mxu0 %v259
    %468 = vmatpush.msra.mxu0 %v255
    %469 = vmatpush.msra.mxu0 %v251
    %470 = vmatpush.msra.mxu0 %v247
    %471 = vmatpush.msra.mxu0 %v243
    %472 = vmatpush.msra.mxu0 %v239
    %473 = vmatpush.msra.mxu0 %v235
    %474 = vmatpush.msra.mxu0 %v231
    %475 = vmatpush.msra.mxu0 %v227
    %476 = vmatpush.msra.mxu0 %v223
    %477 = vmatpush.msra.mxu0 %v219
    %478 = vmatpush.msra.mxu0 %v215
    %479 = vmatpush.msra.mxu0 %v211
    %480 = vmatmul.f32.gmra.mxu0 %v419
    %v481 = vpop.f32.mrf.mxu0
    %v482 = vadd.f32 0.0, %v481
    %483 = vdwg.mxu0
    %484 = vmatpush.msra.mxu0 %v272
    %485 = vmatpush.msra.mxu0 %v268
    %486 = vmatpush.msra.mxu0 %v264
    %487 = vmatpush.msra.mxu0 %v260
    %488 = vmatpush.msra.mxu0 %v256
    %489 = vmatpush.msra.mxu0 %v252
    %490 = vmatpush.msra.mxu0 %v248
    %491 = vmatpush.msra.mxu0 %v244
    %492 = vmatpush.msra.mxu0 %v240
    %493 = vmatpush.msra.mxu0 %v236
    %494 = vmatpush.msra.mxu0 %v232
    %495 = vmatpush.msra.mxu0 %v228
    %496 = vmatpush.msra.mxu0 %v224
    %497 = vmatpush.msra.mxu0 %v220
    %498 = vmatpush.msra.mxu0 %v216
    %499 = vmatpush.msra.mxu0 %v212
    %500 = vmatmul.f32.gmra.mxu0 %v419
    %v501 = vpop.f32.mrf.mxu0
    %v502 = vadd.f32 0.0, %v501
    %503 = vdwg.mxu0
    %v504 = vadd.f32 %v420, %v442
    %v505 = vadd.f32 %v421, %v462
    %v506 = vadd.f32 %v422, %v482
    %v507 = vadd.f32 %v423, %v502
    %v508 = vxor.u32 %v504, 2147483648
    %v509 = vxor.u32 %v505, 2147483648
    %v510 = vxor.u32 %v506, 2147483648
    %v511 = vmul.f32 %v508, 1.442695
    %v512 = vpow.pop %v511
    %v513 = vmul.f32 %v509, 1.442695
    %v514 = vpow.pop %v513
    %v515 = vmul.f32 %v510, 1.442695
    %v516 = vpow.pop %v515
    %v517 = vadd.f32 %v512, 1.0
    %v518 = vadd.f32 %v514, 1.0
    %v519 = vadd.f32 %v516, 1.0
    %v520 = vrcp.pop %v517
    %v521 = vmul.f32 %v517, %v520
    %v522 = vsub.f32 1.0, %v521
    %v523 = vmul.f32 %v520, %v522
    %v524 = vadd.f32 %v520, %v523
    %vm525 = vweird.f32 %v517
    %vm526 = vweird.f32 %v520
    %vm527 = vmor %vm525, %vm526
    %v528 = vsel %vm527, %v520, %v524
    %v529 = vand.u32 2147483647, %v517
    %vm530 = vcmp.eq.f32.partialorder %v529, 8.507059e+37
    %v531 = vand.u32 %v517, 2147483648
    %v532 = vor.u32 1.1754944e-38, %v531
    %v533 = vsel %vm530, %v532, %v528
    %v534 = vmul.f32 1.0, %v533
    %v535 = vrcp.pop %v518
    %v536 = vmul.f32 %v518, %v535
    %v537 = vsub.f32 1.0, %v536
    %v538 = vmul.f32 %v535, %v537
    %v539 = vadd.f32 %v535, %v538
    %vm540 = vweird.f32 %v518
    %vm541 = vweird.f32 %v535
    %vm542 = vmor %vm540, %vm541
    %v543 = vsel %vm542, %v535, %v539
    %v544 = vand.u32 2147483647, %v518
    %vm545 = vcmp.eq.f32.partialorder %v544, 8.507059e+37
    %v546 = vand.u32 %v518, 2147483648
    %v547 = vor.u32 1.1754944e-38, %v546
    %v548 = vsel %vm545, %v547, %v543
    %v549 = vmul.f32 1.0, %v548
    %v550 = vrcp.pop %v519
    %v551 = vmul.f32 %v519, %v550
    %v552 = vsub.f32 1.0, %v551
    %v553 = vmul.f32 %v550, %v552
    %v554 = vadd.f32 %v550, %v553
    %vm555 = vweird.f32 %v519
    %vm556 = vweird.f32 %v550
    %vm557 = vmor %vm555, %vm556
    %v558 = vsel %vm557, %v550, %v554
    %v559 = vand.u32 2147483647, %v519
    %vm560 = vcmp.eq.f32.partialorder %v559, 8.507059e+37
    %v561 = vand.u32 %v519, 2147483648
    %v562 = vor.u32 1.1754944e-38, %v561
    %v563 = vsel %vm560, %v562, %v558
    %v564 = vmul.f32 1.0, %v563
    %v565 = vtanh.pop %v507
    %v566 = vmul.f32 %v549, %v417
    %v567 = vmul.f32 %v534, %v565
    %v568 = vadd.f32 %v566, %v567
    %v569 = vtanh.pop %v568
    %v570 = vmul.f32 %v564, %v569
    %v571 = vld [vmem:[#allocation2 + $0x40] sm:$0xff]
    %v572 = vld [vmem:[#allocation2 + $0x48] sm:$0xff]
    %v573 = vld [vmem:[#allocation2 + $0x50] sm:$0xff]
    %v574 = vld [vmem:[#allocation2 + $0x58] sm:$0xff]
    %575 = vmatpush.msra.mxu0 %v269
    %576 = vmatpush.msra.mxu0 %v265
    %577 = vmatpush.msra.mxu0 %v261
    %578 = vmatpush.msra.mxu0 %v257
    %579 = vmatpush.msra.mxu0 %v253
    %580 = vmatpush.msra.mxu0 %v249
    %581 = vmatpush.msra.mxu0 %v245
    %582 = vmatpush.msra.mxu0 %v241
    %583 = vmatpush.msra.mxu0 %v237
    %584 = vmatpush.msra.mxu0 %v233
    %585 = vmatpush.msra.mxu0 %v229
    %586 = vmatpush.msra.mxu0 %v225
    %587 = vmatpush.msra.mxu0 %v221
    %588 = vmatpush.msra.mxu0 %v217
    %589 = vmatpush.msra.mxu0 %v213
    %590 = vmatpush.msra.mxu0 %v209
    %591 = vmatmul.f32.gmra.mxu0 %v570
    %v592 = vpop.f32.mrf.mxu0
    %v593 = vadd.f32 0.0, %v592
    %594 = vdwg.mxu0
    %595 = vmatpush.msra.mxu0 %v270
    %596 = vmatpush.msra.mxu0 %v266
    %597 = vmatpush.msra.mxu0 %v262
    %598 = vmatpush.msra.mxu0 %v258
    %599 = vmatpush.msra.mxu0 %v254
    %600 = vmatpush.msra.mxu0 %v250
    %601 = vmatpush.msra.mxu0 %v246
    %602 = vmatpush.msra.mxu0 %v242
    %603 = vmatpush.msra.mxu0 %v238
    %604 = vmatpush.msra.mxu0 %v234
    %605 = vmatpush.msra.mxu0 %v230
    %606 = vmatpush.msra.mxu0 %v226
    %607 = vmatpush.msra.mxu0 %v222
    %608 = vmatpush.msra.mxu0 %v218
    %609 = vmatpush.msra.mxu0 %v214
    %610 = vmatpush.msra.mxu0 %v210
    %611 = vmatmul.f32.gmra.mxu0 %v570
    %v612 = vpop.f32.mrf.mxu0
    %v613 = vadd.f32 0.0, %v612
    %614 = vdwg.mxu0
    %615 = vmatpush.msra.mxu0 %v271
    %616 = vmatpush.msra.mxu0 %v267
    %617 = vmatpush.msra.mxu0 %v263
    %618 = vmatpush.msra.mxu0 %v259
    %619 = vmatpush.msra.mxu0 %v255
    %620 = vmatpush.msra.mxu0 %v251
    %621 = vmatpush.msra.mxu0 %v247
    %622 = vmatpush.msra.mxu0 %v243
    %623 = vmatpush.msra.mxu0 %v239
    %624 = vmatpush.msra.mxu0 %v235
    %625 = vmatpush.msra.mxu0 %v231
    %626 = vmatpush.msra.mxu0 %v227
    %627 = vmatpush.msra.mxu0 %v223
    %628 = vmatpush.msra.mxu0 %v219
    %629 = vmatpush.msra.mxu0 %v215
    %630 = vmatpush.msra.mxu0 %v211
    %631 = vmatmul.f32.gmra.mxu0 %v570
    %v632 = vpop.f32.mrf.mxu0
    %v633 = vadd.f32 0.0, %v632
    %634 = vdwg.mxu0
    %635 = vmatpush.msra.mxu0 %v272
    %636 = vmatpush.msra.mxu0 %v268
    %637 = vmatpush.msra.mxu0 %v264
    %638 = vmatpush.msra.mxu0 %v260
    %639 = vmatpush.msra.mxu0 %v256
    %640 = vmatpush.msra.mxu0 %v252
    %641 = vmatpush.msra.mxu0 %v248
    %642 = vmatpush.msra.mxu0 %v244
    %643 = vmatpush.msra.mxu0 %v240
    %644 = vmatpush.msra.mxu0 %v236
    %645 = vmatpush.msra.mxu0 %v232
    %646 = vmatpush.msra.mxu0 %v228
    %647 = vmatpush.msra.mxu0 %v224
    %648 = vmatpush.msra.mxu0 %v220
    %649 = vmatpush.msra.mxu0 %v216
    %650 = vmatpush.msra.mxu0 %v212
    %651 = vmatmul.f32.gmra.mxu0 %v570
    %v652 = vpop.f32.mrf.mxu0
    %v653 = vadd.f32 0.0, %v652
    %654 = vdwg.mxu0
    %v655 = vadd.f32 %v571, %v593
    %v656 = vadd.f32 %v572, %v613
    %v657 = vadd.f32 %v573, %v633
    %v658 = vadd.f32 %v574, %v653
    %v659 = vxor.u32 %v655, 2147483648
    %v660 = vxor.u32 %v656, 2147483648
    %v661 = vxor.u32 %v657, 2147483648
    %v662 = vmul.f32 %v659, 1.442695
    %v663 = vpow.pop %v662
    %v664 = vmul.f32 %v660, 1.442695
    %v665 = vpow.pop %v664
    %v666 = vmul.f32 %v661, 1.442695
    %v667 = vpow.pop %v666
    %v668 = vadd.f32 %v663, 1.0
    %v669 = vadd.f32 %v665, 1.0
    %v670 = vadd.f32 %v667, 1.0
    %v671 = vrcp.pop %v668
    %v672 = vmul.f32 %v668, %v671
    %v673 = vsub.f32 1.0, %v672
    %v674 = vmul.f32 %v671, %v673
    %v675 = vadd.f32 %v671, %v674
    %vm676 = vweird.f32 %v668
    %vm677 = vweird.f32 %v671
    %vm678 = vmor %vm676, %vm677
    %v679 = vsel %vm678, %v671, %v675
    %v680 = vand.u32 2147483647, %v668
    %vm681 = vcmp.eq.f32.partialorder %v680, 8.507059e+37
    %v682 = vand.u32 %v668, 2147483648
    %v683 = vor.u32 1.1754944e-38, %v682
    %v684 = vsel %vm681, %v683, %v679
    %v685 = vmul.f32 1.0, %v684
    %v686 = vrcp.pop %v669
    %v687 = vmul.f32 %v669, %v686
    %v688 = vsub.f32 1.0, %v687
    %v689 = vmul.f32 %v686, %v688
    %v690 = vadd.f32 %v686, %v689
    %vm691 = vweird.f32 %v669
    %vm692 = vweird.f32 %v686
    %vm693 = vmor %vm691, %vm692
    %v694 = vsel %vm693, %v686, %v690
    %v695 = vand.u32 2147483647, %v669
    %vm696 = vcmp.eq.f32.partialorder %v695, 8.507059e+37
    %v697 = vand.u32 %v669, 2147483648
    %v698 = vor.u32 1.1754944e-38, %v697
    %v699 = vsel %vm696, %v698, %v694
    %v700 = vmul.f32 1.0, %v699
    %v701 = vrcp.pop %v670
    %v702 = vmul.f32 %v670, %v701
    %v703 = vsub.f32 1.0, %v702
    %v704 = vmul.f32 %v701, %v703
    %v705 = vadd.f32 %v701, %v704
    %vm706 = vweird.f32 %v670
    %vm707 = vweird.f32 %v701
    %vm708 = vmor %vm706, %vm707
    %v709 = vsel %vm708, %v701, %v705
    %v710 = vand.u32 2147483647, %v670
    %vm711 = vcmp.eq.f32.partialorder %v710, 8.507059e+37
    %v712 = vand.u32 %v670, 2147483648
    %v713 = vor.u32 1.1754944e-38, %v712
    %v714 = vsel %vm711, %v713, %v709
    %v715 = vmul.f32 1.0, %v714
    %v716 = vtanh.pop %v658
    %v717 = vmul.f32 %v700, %v568
    %v718 = vmul.f32 %v685, %v716
    %v719 = vadd.f32 %v717, %v718
    %v720 = vtanh.pop %v719
    %v721 = vmul.f32 %v715, %v720
    %v722 = vld [vmem:[#allocation2 + $0x60] sm:$0xff]
    %v723 = vld [vmem:[#allocation2 + $0x68] sm:$0xff]
    %v724 = vld [vmem:[#allocation2 + $0x70] sm:$0xff]
    %v725 = vld [vmem:[#allocation2 + $0x78] sm:$0xff]
    %726 = vmatpush.msra.mxu0 %v269
    %727 = vmatpush.msra.mxu0 %v265
    %728 = vmatpush.msra.mxu0 %v261
    %729 = vmatpush.msra.mxu0 %v257
    %730 = vmatpush.msra.mxu0 %v253
    %731 = vmatpush.msra.mxu0 %v249
    %732 = vmatpush.msra.mxu0 %v245
    %733 = vmatpush.msra.mxu0 %v241
    %734 = vmatpush.msra.mxu0 %v237
    %735 = vmatpush.msra.mxu0 %v233
    %736 = vmatpush.msra.mxu0 %v229
    %737 = vmatpush.msra.mxu0 %v225
    %738 = vmatpush.msra.mxu0 %v221
    %739 = vmatpush.msra.mxu0 %v217
    %740 = vmatpush.msra.mxu0 %v213
    %741 = vmatpush.msra.mxu0 %v209
    %742 = vmatmul.f32.gmra.mxu0 %v721
    %v743 = vpop.f32.mrf.mxu0
    %v744 = vadd.f32 0.0, %v743
    %745 = vdwg.mxu0
    %746 = vmatpush.msra.mxu0 %v270
    %747 = vmatpush.msra.mxu0 %v266
    %748 = vmatpush.msra.mxu0 %v262
    %749 = vmatpush.msra.mxu0 %v258
    %750 = vmatpush.msra.mxu0 %v254
    %751 = vmatpush.msra.mxu0 %v250
    %752 = vmatpush.msra.mxu0 %v246
    %753 = vmatpush.msra.mxu0 %v242
    %754 = vmatpush.msra.mxu0 %v238
    %755 = vmatpush.msra.mxu0 %v234
    %756 = vmatpush.msra.mxu0 %v230
    %757 = vmatpush.msra.mxu0 %v226
    %758 = vmatpush.msra.mxu0 %v222
    %759 = vmatpush.msra.mxu0 %v218
    %760 = vmatpush.msra.mxu0 %v214
    %761 = vmatpush.msra.mxu0 %v210
    %762 = vmatmul.f32.gmra.mxu0 %v721
    %v763 = vpop.f32.mrf.mxu0
    %v764 = vadd.f32 0.0, %v763
    %765 = vdwg.mxu0
    %766 = vmatpush.msra.mxu0 %v271
    %767 = vmatpush.msra.mxu0 %v267
    %768 = vmatpush.msra.mxu0 %v263
    %769 = vmatpush.msra.mxu0 %v259
    %770 = vmatpush.msra.mxu0 %v255
    %771 = vmatpush.msra.mxu0 %v251
    %772 = vmatpush.msra.mxu0 %v247
    %773 = vmatpush.msra.mxu0 %v243
    %774 = vmatpush.msra.mxu0 %v239
    %775 = vmatpush.msra.mxu0 %v235
    %776 = vmatpush.msra.mxu0 %v231
    %777 = vmatpush.msra.mxu0 %v227
    %778 = vmatpush.msra.mxu0 %v223
    %779 = vmatpush.msra.mxu0 %v219
    %780 = vmatpush.msra.mxu0 %v215
    %781 = vmatpush.msra.mxu0 %v211
    %782 = vmatmul.f32.gmra.mxu0 %v721
    %v783 = vpop.f32.mrf.mxu0
    %v784 = vadd.f32 0.0, %v783
    %785 = vdwg.mxu0
    %786 = vmatpush.msra.mxu0 %v272
    %787 = vmatpush.msra.mxu0 %v268
    %788 = vmatpush.msra.mxu0 %v264
    %789 = vmatpush.msra.mxu0 %v260
    %790 = vmatpush.msra.mxu0 %v256
    %791 = vmatpush.msra.mxu0 %v252
    %792 = vmatpush.msra.mxu0 %v248
    %793 = vmatpush.msra.mxu0 %v244
    %794 = vmatpush.msra.mxu0 %v240
    %795 = vmatpush.msra.mxu0 %v236
    %796 = vmatpush.msra.mxu0 %v232
    %797 = vmatpush.msra.mxu0 %v228
    %798 = vmatpush.msra.mxu0 %v224
    %799 = vmatpush.msra.mxu0 %v220
    %800 = vmatpush.msra.mxu0 %v216
    %801 = vmatpush.msra.mxu0 %v212
    %802 = vmatmul.f32.gmra.mxu0 %v721
    %v803 = vpop.f32.mrf.mxu0
    %v804 = vadd.f32 0.0, %v803
    %805 = vdwg.mxu0
    %v806 = vadd.f32 %v722, %v744
    %v807 = vadd.f32 %v723, %v764
    %v808 = vadd.f32 %v724, %v784
    %v809 = vadd.f32 %v725, %v804
    %v810 = vxor.u32 %v806, 2147483648
    %v811 = vxor.u32 %v807, 2147483648
    %v812 = vxor.u32 %v808, 2147483648
    %v813 = vmul.f32 %v810, 1.442695
    %v814 = vpow.pop %v813
    %v815 = vmul.f32 %v811, 1.442695
    %v816 = vpow.pop %v815
    %v817 = vmul.f32 %v812, 1.442695
    %v818 = vpow.pop %v817
    %v819 = vadd.f32 %v814, 1.0
    %v820 = vadd.f32 %v816, 1.0
    %v821 = vadd.f32 %v818, 1.0
    %v822 = vrcp.pop %v819
    %v823 = vmul.f32 %v819, %v822
    %v824 = vsub.f32 1.0, %v823
    %v825 = vmul.f32 %v822, %v824
    %v826 = vadd.f32 %v822, %v825
    %vm827 = vweird.f32 %v819
    %vm828 = vweird.f32 %v822
    %vm829 = vmor %vm827, %vm828
    %v830 = vsel %vm829, %v822, %v826
    %v831 = vand.u32 2147483647, %v819
    %vm832 = vcmp.eq.f32.partialorder %v831, 8.507059e+37
    %v833 = vand.u32 %v819, 2147483648
    %v834 = vor.u32 1.1754944e-38, %v833
    %v835 = vsel %vm832, %v834, %v830
    %v836 = vmul.f32 1.0, %v835
    %v837 = vrcp.pop %v820
    %v838 = vmul.f32 %v820, %v837
    %v839 = vsub.f32 1.0, %v838
    %v840 = vmul.f32 %v837, %v839
    %v841 = vadd.f32 %v837, %v840
    %vm842 = vweird.f32 %v820
    %vm843 = vweird.f32 %v837
    %vm844 = vmor %vm842, %vm843
    %v845 = vsel %vm844, %v837, %v841
    %v846 = vand.u32 2147483647, %v820
    %vm847 = vcmp.eq.f32.partialorder %v846, 8.507059e+37
    %v848 = vand.u32 %v820, 2147483648
    %v849 = vor.u32 1.1754944e-38, %v848
    %v850 = vsel %vm847, %v849, %v845
    %v851 = vmul.f32 1.0, %v850
    %v852 = vrcp.pop %v821
    %v853 = vmul.f32 %v821, %v852
    %v854 = vsub.f32 1.0, %v853
    %v855 = vmul.f32 %v852, %v854
    %v856 = vadd.f32 %v852, %v855
    %vm857 = vweird.f32 %v821
    %vm858 = vweird.f32 %v852
    %vm859 = vmor %vm857, %vm858
    %v860 = vsel %vm859, %v852, %v856
    %v861 = vand.u32 2147483647, %v821
    %vm862 = vcmp.eq.f32.partialorder %v861, 8.507059e+37
    %v863 = vand.u32 %v821, 2147483648
    %v864 = vor.u32 1.1754944e-38, %v863
    %v865 = vsel %vm862, %v864, %v860
    %v866 = vmul.f32 1.0, %v865
    %v867 = vtanh.pop %v809
    %v868 = vmul.f32 %v851, %v719
    %v869 = vmul.f32 %v836, %v867
    %v870 = vadd.f32 %v868, %v869
    %v871 = vtanh.pop %v870
    %v872 = vmul.f32 %v866, %v871
    %v873 = vld [vmem:[#allocation2 + $0x80] sm:$0xff]
    %v874 = vld [vmem:[#allocation2 + $0x88] sm:$0xff]
    %v875 = vld [vmem:[#allocation2 + $0x90] sm:$0xff]
    %v876 = vld [vmem:[#allocation2 + $0x98] sm:$0xff]
    %877 = vmatpush.msra.mxu0 %v269
    %878 = vmatpush.msra.mxu0 %v265
    %879 = vmatpush.msra.mxu0 %v261
    %880 = vmatpush.msra.mxu0 %v257
    %881 = vmatpush.msra.mxu0 %v253
    %882 = vmatpush.msra.mxu0 %v249
    %883 = vmatpush.msra.mxu0 %v245
    %884 = vmatpush.msra.mxu0 %v241
    %885 = vmatpush.msra.mxu0 %v237
    %886 = vmatpush.msra.mxu0 %v233
    %887 = vmatpush.msra.mxu0 %v229
    %888 = vmatpush.msra.mxu0 %v225
    %889 = vmatpush.msra.mxu0 %v221
    %890 = vmatpush.msra.mxu0 %v217
    %891 = vmatpush.msra.mxu0 %v213
    %892 = vmatpush.msra.mxu0 %v209
    %893 = vmatmul.f32.gmra.mxu0 %v872
    %v894 = vpop.f32.mrf.mxu0
    %v895 = vadd.f32 0.0, %v894
    %896 = vdwg.mxu0
    %897 = vmatpush.msra.mxu0 %v270
    %898 = vmatpush.msra.mxu0 %v266
    %899 = vmatpush.msra.mxu0 %v262
    %900 = vmatpush.msra.mxu0 %v258
    %901 = vmatpush.msra.mxu0 %v254
    %902 = vmatpush.msra.mxu0 %v250
    %903 = vmatpush.msra.mxu0 %v246
    %904 = vmatpush.msra.mxu0 %v242
    %905 = vmatpush.msra.mxu0 %v238
    %906 = vmatpush.msra.mxu0 %v234
    %907 = vmatpush.msra.mxu0 %v230
    %908 = vmatpush.msra.mxu0 %v226
    %909 = vmatpush.msra.mxu0 %v222
    %910 = vmatpush.msra.mxu0 %v218
    %911 = vmatpush.msra.mxu0 %v214
    %912 = vmatpush.msra.mxu0 %v210
    %913 = vmatmul.f32.gmra.mxu0 %v872
    %v914 = vpop.f32.mrf.mxu0
    %v915 = vadd.f32 0.0, %v914
    %916 = vdwg.mxu0
    %917 = vmatpush.msra.mxu0 %v271
    %918 = vmatpush.msra.mxu0 %v267
    %919 = vmatpush.msra.mxu0 %v263
    %920 = vmatpush.msra.mxu0 %v259
    %921 = vmatpush.msra.mxu0 %v255
    %922 = vmatpush.msra.mxu0 %v251
    %923 = vmatpush.msra.mxu0 %v247
    %924 = vmatpush.msra.mxu0 %v243
    %925 = vmatpush.msra.mxu0 %v239
    %926 = vmatpush.msra.mxu0 %v235
    %927 = vmatpush.msra.mxu0 %v231
    %928 = vmatpush.msra.mxu0 %v227
    %929 = vmatpush.msra.mxu0 %v223
    %930 = vmatpush.msra.mxu0 %v219
    %931 = vmatpush.msra.mxu0 %v215
    %932 = vmatpush.msra.mxu0 %v211
    %933 = vmatmul.f32.gmra.mxu0 %v872
    %v934 = vpop.f32.mrf.mxu0
    %v935 = vadd.f32 0.0, %v934
    %936 = vdwg.mxu0
    %937 = vmatpush.msra.mxu0 %v272
    %938 = vmatpush.msra.mxu0 %v268
    %939 = vmatpush.msra.mxu0 %v264
    %940 = vmatpush.msra.mxu0 %v260
    %941 = vmatpush.msra.mxu0 %v256
    %942 = vmatpush.msra.mxu0 %v252
    %943 = vmatpush.msra.mxu0 %v248
    %944 = vmatpush.msra.mxu0 %v244
    %945 = vmatpush.msra.mxu0 %v240
    %946 = vmatpush.msra.mxu0 %v236
    %947 = vmatpush.msra.mxu0 %v232
    %948 = vmatpush.msra.mxu0 %v228
    %949 = vmatpush.msra.mxu0 %v224
    %950 = vmatpush.msra.mxu0 %v220
    %951 = vmatpush.msra.mxu0 %v216
    %952 = vmatpush.msra.mxu0 %v212
    %953 = vmatmul.f32.gmra.mxu0 %v872
    %v954 = vpop.f32.mrf.mxu0
    %v955 = vadd.f32 0.0, %v954
    %956 = vdwg.mxu0
    %v957 = vadd.f32 %v873, %v895
    %v958 = vadd.f32 %v874, %v915
    %v959 = vadd.f32 %v875, %v935
    %v960 = vadd.f32 %v876, %v955
    %v961 = vxor.u32 %v957, 2147483648
    %v962 = vxor.u32 %v958, 2147483648
    %v963 = vxor.u32 %v959, 2147483648
    %v964 = vmul.f32 %v961, 1.442695
    %v965 = vpow.pop %v964
    %v966 = vmul.f32 %v962, 1.442695
    %v967 = vpow.pop %v966
    %v968 = vmul.f32 %v963, 1.442695
    %v969 = vpow.pop %v968
    %v970 = vadd.f32 %v965, 1.0
    %v971 = vadd.f32 %v967, 1.0
    %v972 = vadd.f32 %v969, 1.0
    %v973 = vrcp.pop %v970
    %v974 = vmul.f32 %v970, %v973
    %v975 = vsub.f32 1.0, %v974
    %v976 = vmul.f32 %v973, %v975
    %v977 = vadd.f32 %v973, %v976
    %vm978 = vweird.f32 %v970
    %vm979 = vweird.f32 %v973
    %vm980 = vmor %vm978, %vm979
    %v981 = vsel %vm980, %v973, %v977
    %v982 = vand.u32 2147483647, %v970
    %vm983 = vcmp.eq.f32.partialorder %v982, 8.507059e+37
    %v984 = vand.u32 %v970, 2147483648
    %v985 = vor.u32 1.1754944e-38, %v984
    %v986 = vsel %vm983, %v985, %v981
    %v987 = vmul.f32 1.0, %v986
    %v988 = vrcp.pop %v971
    %v989 = vmul.f32 %v971, %v988
    %v990 = vsub.f32 1.0, %v989
    %v991 = vmul.f32 %v988, %v990
    %v992 = vadd.f32 %v988, %v991
    %vm993 = vweird.f32 %v971
    %vm994 = vweird.f32 %v988
    %vm995 = vmor %vm993, %vm994
    %v996 = vsel %vm995, %v988, %v992
    %v997 = vand.u32 2147483647, %v971
    %vm998 = vcmp.eq.f32.partialorder %v997, 8.507059e+37
    %v999 = vand.u32 %v971, 2147483648
    %v1000 = vor.u32 1.1754944e-38, %v999
    %v1001 = vsel %vm998, %v1000, %v996
    %v1002 = vmul.f32 1.0, %v1001
    %v1003 = vrcp.pop %v972
    %v1004 = vmul.f32 %v972, %v1003
    %v1005 = vsub.f32 1.0, %v1004
    %v1006 = vmul.f32 %v1003, %v1005
    %v1007 = vadd.f32 %v1003, %v1006
    %vm1008 = vweird.f32 %v972
    %vm1009 = vweird.f32 %v1003
    %vm1010 = vmor %vm1008, %vm1009
    %v1011 = vsel %vm1010, %v1003, %v1007
    %v1012 = vand.u32 2147483647, %v972
    %vm1013 = vcmp.eq.f32.partialorder %v1012, 8.507059e+37
    %v1014 = vand.u32 %v972, 2147483648
    %v1015 = vor.u32 1.1754944e-38, %v1014
    %v1016 = vsel %vm1013, %v1015, %v1011
    %v1017 = vmul.f32 1.0, %v1016
    %v1018 = vtanh.pop %v960
    %v1019 = vmul.f32 %v1002, %v870
    %v1020 = vmul.f32 %v987, %v1018
    %v1021 = vadd.f32 %v1019, %v1020
    %v1022 = vtanh.pop %v1021
    %v1023 = vmul.f32 %v1017, %v1022
    %v1024 = vld [vmem:[#allocation2 + $0xa0] sm:$0xff]
    %v1025 = vld [vmem:[#allocation2 + $0xa8] sm:$0xff]
    %v1026 = vld [vmem:[#allocation2 + $0xb0] sm:$0xff]
    %v1027 = vld [vmem:[#allocation2 + $0xb8] sm:$0xff]
    %1028 = vmatpush.msra.mxu0 %v269
    %1029 = vmatpush.msra.mxu0 %v265
    %1030 = vmatpush.msra.mxu0 %v261
    %1031 = vmatpush.msra.mxu0 %v257
    %1032 = vmatpush.msra.mxu0 %v253
    %1033 = vmatpush.msra.mxu0 %v249
    %1034 = vmatpush.msra.mxu0 %v245
    %1035 = vmatpush.msra.mxu0 %v241
    %1036 = vmatpush.msra.mxu0 %v237
    %1037 = vmatpush.msra.mxu0 %v233
    %1038 = vmatpush.msra.mxu0 %v229
    %1039 = vmatpush.msra.mxu0 %v225
    %1040 = vmatpush.msra.mxu0 %v221
    %1041 = vmatpush.msra.mxu0 %v217
    %1042 = vmatpush.msra.mxu0 %v213
    %1043 = vmatpush.msra.mxu0 %v209
    %1044 = vmatmul.f32.gmra.mxu0 %v1023
    %v1045 = vpop.f32.mrf.mxu0
    %v1046 = vadd.f32 0.0, %v1045
    %1047 = vdwg.mxu0
    %1048 = vmatpush.msra.mxu0 %v270
    %1049 = vmatpush.msra.mxu0 %v266
    %1050 = vmatpush.msra.mxu0 %v262
    %1051 = vmatpush.msra.mxu0 %v258
    %1052 = vmatpush.msra.mxu0 %v254
    %1053 = vmatpush.msra.mxu0 %v250
    %1054 = vmatpush.msra.mxu0 %v246
    %1055 = vmatpush.msra.mxu0 %v242
    %1056 = vmatpush.msra.mxu0 %v238
    %1057 = vmatpush.msra.mxu0 %v234
    %1058 = vmatpush.msra.mxu0 %v230
    %1059 = vmatpush.msra.mxu0 %v226
    %1060 = vmatpush.msra.mxu0 %v222
    %1061 = vmatpush.msra.mxu0 %v218
    %1062 = vmatpush.msra.mxu0 %v214
    %1063 = vmatpush.msra.mxu0 %v210
    %1064 = vmatmul.f32.gmra.mxu0 %v1023
    %v1065 = vpop.f32.mrf.mxu0
    %v1066 = vadd.f32 0.0, %v1065
    %1067 = vdwg.mxu0
    %1068 = vmatpush.msra.mxu0 %v271
    %1069 = vmatpush.msra.mxu0 %v267
    %1070 = vmatpush.msra.mxu0 %v263
    %1071 = vmatpush.msra.mxu0 %v259
    %1072 = vmatpush.msra.mxu0 %v255
    %1073 = vmatpush.msra.mxu0 %v251
    %1074 = vmatpush.msra.mxu0 %v247
    %1075 = vmatpush.msra.mxu0 %v243
    %1076 = vmatpush.msra.mxu0 %v239
    %1077 = vmatpush.msra.mxu0 %v235
    %1078 = vmatpush.msra.mxu0 %v231
    %1079 = vmatpush.msra.mxu0 %v227
    %1080 = vmatpush.msra.mxu0 %v223
    %1081 = vmatpush.msra.mxu0 %v219
    %1082 = vmatpush.msra.mxu0 %v215
    %1083 = vmatpush.msra.mxu0 %v211
    %1084 = vmatmul.f32.gmra.mxu0 %v1023
    %v1085 = vpop.f32.mrf.mxu0
    %v1086 = vadd.f32 0.0, %v1085
    %1087 = vdwg.mxu0
    %1088 = vmatpush.msra.mxu0 %v272
    %1089 = vmatpush.msra.mxu0 %v268
    %1090 = vmatpush.msra.mxu0 %v264
    %1091 = vmatpush.msra.mxu0 %v260
    %1092 = vmatpush.msra.mxu0 %v256
    %1093 = vmatpush.msra.mxu0 %v252
    %1094 = vmatpush.msra.mxu0 %v248
    %1095 = vmatpush.msra.mxu0 %v244
    %1096 = vmatpush.msra.mxu0 %v240
    %1097 = vmatpush.msra.mxu0 %v236
    %1098 = vmatpush.msra.mxu0 %v232
    %1099 = vmatpush.msra.mxu0 %v228
    %1100 = vmatpush.msra.mxu0 %v224
    %1101 = vmatpush.msra.mxu0 %v220
    %1102 = vmatpush.msra.mxu0 %v216
    %1103 = vmatpush.msra.mxu0 %v212
    %1104 = vmatmul.f32.gmra.mxu0 %v1023
    %v1105 = vpop.f32.mrf.mxu0
    %v1106 = vadd.f32 0.0, %v1105
    %1107 = vdwg.mxu0
    %v1108 = vadd.f32 %v1024, %v1046
    %v1109 = vadd.f32 %v1025, %v1066
    %v1110 = vadd.f32 %v1026, %v1086
    %v1111 = vadd.f32 %v1027, %v1106
    %v1112 = vxor.u32 %v1108, 2147483648
    %v1113 = vxor.u32 %v1109, 2147483648
    %v1114 = vxor.u32 %v1110, 2147483648
    %v1115 = vmul.f32 %v1112, 1.442695
    %v1116 = vpow.pop %v1115
    %v1117 = vmul.f32 %v1113, 1.442695
    %v1118 = vpow.pop %v1117
    %v1119 = vmul.f32 %v1114, 1.442695
    %v1120 = vpow.pop %v1119
    %v1121 = vadd.f32 %v1116, 1.0
    %v1122 = vadd.f32 %v1118, 1.0
    %v1123 = vadd.f32 %v1120, 1.0
    %v1124 = vrcp.pop %v1121
    %v1125 = vmul.f32 %v1121, %v1124
    %v1126 = vsub.f32 1.0, %v1125
    %v1127 = vmul.f32 %v1124, %v1126
    %v1128 = vadd.f32 %v1124, %v1127
    %vm1129 = vweird.f32 %v1121
    %vm1130 = vweird.f32 %v1124
    %vm1131 = vmor %vm1129, %vm1130
    %v1132 = vsel %vm1131, %v1124, %v1128
    %v1133 = vand.u32 2147483647, %v1121
    %vm1134 = vcmp.eq.f32.partialorder %v1133, 8.507059e+37
    %v1135 = vand.u32 %v1121, 2147483648
    %v1136 = vor.u32 1.1754944e-38, %v1135
    %v1137 = vsel %vm1134, %v1136, %v1132
    %v1138 = vmul.f32 1.0, %v1137
    %v1139 = vrcp.pop %v1122
    %v1140 = vmul.f32 %v1122, %v1139
    %v1141 = vsub.f32 1.0, %v1140
    %v1142 = vmul.f32 %v1139, %v1141
    %v1143 = vadd.f32 %v1139, %v1142
    %vm1144 = vweird.f32 %v1122
    %vm1145 = vweird.f32 %v1139
    %vm1146 = vmor %vm1144, %vm1145
    %v1147 = vsel %vm1146, %v1139, %v1143
    %v1148 = vand.u32 2147483647, %v1122
    %vm1149 = vcmp.eq.f32.partialorder %v1148, 8.507059e+37
    %v1150 = vand.u32 %v1122, 2147483648
    %v1151 = vor.u32 1.1754944e-38, %v1150
    %v1152 = vsel %vm1149, %v1151, %v1147
    %v1153 = vmul.f32 1.0, %v1152
    %v1154 = vrcp.pop %v1123
    %v1155 = vmul.f32 %v1123, %v1154
    %v1156 = vsub.f32 1.0, %v1155
    %v1157 = vmul.f32 %v1154, %v1156
    %v1158 = vadd.f32 %v1154, %v1157
    %vm1159 = vweird.f32 %v1123
    %vm1160 = vweird.f32 %v1154
    %vm1161 = vmor %vm1159, %vm1160
    %v1162 = vsel %vm1161, %v1154, %v1158
    %v1163 = vand.u32 2147483647, %v1123
    %vm1164 = vcmp.eq.f32.partialorder %v1163, 8.507059e+37
    %v1165 = vand.u32 %v1123, 2147483648
    %v1166 = vor.u32 1.1754944e-38, %v1165
    %v1167 = vsel %vm1164, %v1166, %v1162
    %v1168 = vmul.f32 1.0, %v1167
    %v1169 = vtanh.pop %v1111
    %v1170 = vmul.f32 %v1153, %v1021
    %v1171 = vmul.f32 %v1138, %v1169
    %v1172 = vadd.f32 %v1170, %v1171
    %v1173 = vtanh.pop %v1172
    %v1174 = vmul.f32 %v1168, %v1173
    %v1175 = vld [vmem:[#allocation2 + $0xc0] sm:$0xff]
    %v1176 = vld [vmem:[#allocation2 + $0xc8] sm:$0xff]
    %v1177 = vld [vmem:[#allocation2 + $0xd0] sm:$0xff]
    %v1178 = vld [vmem:[#allocation2 + $0xd8] sm:$0xff]
    %1179 = vmatpush.msra.mxu0 %v269
    %1180 = vmatpush.msra.mxu0 %v265
    %1181 = vmatpush.msra.mxu0 %v261
    %1182 = vmatpush.msra.mxu0 %v257
    %1183 = vmatpush.msra.mxu0 %v253
    %1184 = vmatpush.msra.mxu0 %v249
    %1185 = vmatpush.msra.mxu0 %v245
    %1186 = vmatpush.msra.mxu0 %v241
    %1187 = vmatpush.msra.mxu0 %v237
    %1188 = vmatpush.msra.mxu0 %v233
    %1189 = vmatpush.msra.mxu0 %v229
    %1190 = vmatpush.msra.mxu0 %v225
    %1191 = vmatpush.msra.mxu0 %v221
    %1192 = vmatpush.msra.mxu0 %v217
    %1193 = vmatpush.msra.mxu0 %v213
    %1194 = vmatpush.msra.mxu0 %v209
    %1195 = vmatmul.f32.gmra.mxu0 %v1174
    %v1196 = vpop.f32.mrf.mxu0
    %v1197 = vadd.f32 0.0, %v1196
    %1198 = vdwg.mxu0
    %1199 = vmatpush.msra.mxu0 %v270
    %1200 = vmatpush.msra.mxu0 %v266
    %1201 = vmatpush.msra.mxu0 %v262
    %1202 = vmatpush.msra.mxu0 %v258
    %1203 = vmatpush.msra.mxu0 %v254
    %1204 = vmatpush.msra.mxu0 %v250
    %1205 = vmatpush.msra.mxu0 %v246
    %1206 = vmatpush.msra.mxu0 %v242
    %1207 = vmatpush.msra.mxu0 %v238
    %1208 = vmatpush.msra.mxu0 %v234
    %1209 = vmatpush.msra.mxu0 %v230
    %1210 = vmatpush.msra.mxu0 %v226
    %1211 = vmatpush.msra.mxu0 %v222
    %1212 = vmatpush.msra.mxu0 %v218
    %1213 = vmatpush.msra.mxu0 %v214
    %1214 = vmatpush.msra.mxu0 %v210
    %1215 = vmatmul.f32.gmra.mxu0 %v1174
    %v1216 = vpop.f32.mrf.mxu0
    %v1217 = vadd.f32 0.0, %v1216
    %1218 = vdwg.mxu0
    %1219 = vmatpush.msra.mxu0 %v271
    %1220 = vmatpush.msra.mxu0 %v267
    %1221 = vmatpush.msra.mxu0 %v263
    %1222 = vmatpush.msra.mxu0 %v259
    %1223 = vmatpush.msra.mxu0 %v255
    %1224 = vmatpush.msra.mxu0 %v251
    %1225 = vmatpush.msra.mxu0 %v247
    %1226 = vmatpush.msra.mxu0 %v243
    %1227 = vmatpush.msra.mxu0 %v239
    %1228 = vmatpush.msra.mxu0 %v235
    %1229 = vmatpush.msra.mxu0 %v231
    %1230 = vmatpush.msra.mxu0 %v227
    %1231 = vmatpush.msra.mxu0 %v223
    %1232 = vmatpush.msra.mxu0 %v219
    %1233 = vmatpush.msra.mxu0 %v215
    %1234 = vmatpush.msra.mxu0 %v211
    %1235 = vmatmul.f32.gmra.mxu0 %v1174
    %v1236 = vpop.f32.mrf.mxu0
    %v1237 = vadd.f32 0.0, %v1236
    %1238 = vdwg.mxu0
    %1239 = vmatpush.msra.mxu0 %v272
    %1240 = vmatpush.msra.mxu0 %v268
    %1241 = vmatpush.msra.mxu0 %v264
    %1242 = vmatpush.msra.mxu0 %v260
    %1243 = vmatpush.msra.mxu0 %v256
    %1244 = vmatpush.msra.mxu0 %v252
    %1245 = vmatpush.msra.mxu0 %v248
    %1246 = vmatpush.msra.mxu0 %v244
    %1247 = vmatpush.msra.mxu0 %v240
    %1248 = vmatpush.msra.mxu0 %v236
    %1249 = vmatpush.msra.mxu0 %v232
    %1250 = vmatpush.msra.mxu0 %v228
    %1251 = vmatpush.msra.mxu0 %v224
    %1252 = vmatpush.msra.mxu0 %v220
    %1253 = vmatpush.msra.mxu0 %v216
    %1254 = vmatpush.msra.mxu0 %v212
    %1255 = vmatmul.f32.gmra.mxu0 %v1174
    %v1256 = vpop.f32.mrf.mxu0
    %v1257 = vadd.f32 0.0, %v1256
    %1258 = vdwg.mxu0
    %v1259 = vadd.f32 %v1175, %v1197
    %v1260 = vadd.f32 %v1176, %v1217
    %v1261 = vadd.f32 %v1177, %v1237
    %v1262 = vadd.f32 %v1178, %v1257
    %v1263 = vxor.u32 %v1259, 2147483648
    %v1264 = vxor.u32 %v1260, 2147483648
    %v1265 = vxor.u32 %v1261, 2147483648
    %v1266 = vmul.f32 %v1263, 1.442695
    %v1267 = vpow.pop %v1266
    %v1268 = vmul.f32 %v1264, 1.442695
    %v1269 = vpow.pop %v1268
    %v1270 = vmul.f32 %v1265, 1.442695
    %v1271 = vpow.pop %v1270
    %v1272 = vadd.f32 %v1267, 1.0
    %v1273 = vadd.f32 %v1269, 1.0
    %v1274 = vadd.f32 %v1271, 1.0
    %v1275 = vrcp.pop %v1272
    %v1276 = vmul.f32 %v1272, %v1275
    %v1277 = vsub.f32 1.0, %v1276
    %v1278 = vmul.f32 %v1275, %v1277
    %v1279 = vadd.f32 %v1275, %v1278
    %vm1280 = vweird.f32 %v1272
    %vm1281 = vweird.f32 %v1275
    %vm1282 = vmor %vm1280, %vm1281
    %v1283 = vsel %vm1282, %v1275, %v1279
    %v1284 = vand.u32 2147483647, %v1272
    %vm1285 = vcmp.eq.f32.partialorder %v1284, 8.507059e+37
    %v1286 = vand.u32 %v1272, 2147483648
    %v1287 = vor.u32 1.1754944e-38, %v1286
    %v1288 = vsel %vm1285, %v1287, %v1283
    %v1289 = vmul.f32 1.0, %v1288
    %v1290 = vrcp.pop %v1273
    %v1291 = vmul.f32 %v1273, %v1290
    %v1292 = vsub.f32 1.0, %v1291
    %v1293 = vmul.f32 %v1290, %v1292
    %v1294 = vadd.f32 %v1290, %v1293
    %vm1295 = vweird.f32 %v1273
    %vm1296 = vweird.f32 %v1290
    %vm1297 = vmor %vm1295, %vm1296
    %v1298 = vsel %vm1297, %v1290, %v1294
    %v1299 = vand.u32 2147483647, %v1273
    %vm1300 = vcmp.eq.f32.partialorder %v1299, 8.507059e+37
    %v1301 = vand.u32 %v1273, 2147483648
    %v1302 = vor.u32 1.1754944e-38, %v1301
    %v1303 = vsel %vm1300, %v1302, %v1298
    %v1304 = vmul.f32 1.0, %v1303
    %v1305 = vrcp.pop %v1274
    %v1306 = vmul.f32 %v1274, %v1305
    %v1307 = vsub.f32 1.0, %v1306
    %v1308 = vmul.f32 %v1305, %v1307
    %v1309 = vadd.f32 %v1305, %v1308
    %vm1310 = vweird.f32 %v1274
    %vm1311 = vweird.f32 %v1305
    %vm1312 = vmor %vm1310, %vm1311
    %v1313 = vsel %vm1312, %v1305, %v1309
    %v1314 = vand.u32 2147483647, %v1274
    %vm1315 = vcmp.eq.f32.partialorder %v1314, 8.507059e+37
    %v1316 = vand.u32 %v1274, 2147483648
    %v1317 = vor.u32 1.1754944e-38, %v1316
    %v1318 = vsel %vm1315, %v1317, %v1313
    %v1319 = vmul.f32 1.0, %v1318
    %v1320 = vtanh.pop %v1262
    %v1321 = vmul.f32 %v1304, %v1172
    %v1322 = vmul.f32 %v1289, %v1320
    %v1323 = vadd.f32 %v1321, %v1322
    %v1324 = vtanh.pop %v1323
    %v1325 = vmul.f32 %v1319, %v1324
    %v1326 = vld [vmem:[#allocation2 + $0xe0] sm:$0xff]
    %v1327 = vld [vmem:[#allocation2 + $0xe8] sm:$0xff]
    %v1328 = vld [vmem:[#allocation2 + $0xf0] sm:$0xff]
    %v1329 = vld [vmem:[#allocation2 + $0xf8] sm:$0xff]
    %1330 = vmatpush.msra.mxu0 %v269
    %1331 = vmatpush.msra.mxu0 %v265
    %1332 = vmatpush.msra.mxu0 %v261
    %1333 = vmatpush.msra.mxu0 %v257
    %1334 = vmatpush.msra.mxu0 %v253
    %1335 = vmatpush.msra.mxu0 %v249
    %1336 = vmatpush.msra.mxu0 %v245
    %1337 = vmatpush.msra.mxu0 %v241
    %1338 = vmatpush.msra.mxu0 %v237
    %1339 = vmatpush.msra.mxu0 %v233
    %1340 = vmatpush.msra.mxu0 %v229
    %1341 = vmatpush.msra.mxu0 %v225
    %1342 = vmatpush.msra.mxu0 %v221
    %1343 = vmatpush.msra.mxu0 %v217
    %1344 = vmatpush.msra.mxu0 %v213
    %1345 = vmatpush.msra.mxu0 %v209
    %1346 = vmatmul.f32.gmra.mxu0 %v1325
    %v1347 = vpop.f32.mrf.mxu0
    %v1348 = vadd.f32 0.0, %v1347
    %1349 = vdwg.mxu0
    %1350 = vmatpush.msra.mxu0 %v270
    %1351 = vmatpush.msra.mxu0 %v266
    %1352 = vmatpush.msra.mxu0 %v262
    %1353 = vmatpush.msra.mxu0 %v258
    %1354 = vmatpush.msra.mxu0 %v254
    %1355 = vmatpush.msra.mxu0 %v250
    %1356 = vmatpush.msra.mxu0 %v246
    %1357 = vmatpush.msra.mxu0 %v242
    %1358 = vmatpush.msra.mxu0 %v238
    %1359 = vmatpush.msra.mxu0 %v234
    %1360 = vmatpush.msra.mxu0 %v230
    %1361 = vmatpush.msra.mxu0 %v226
    %1362 = vmatpush.msra.mxu0 %v222
    %1363 = vmatpush.msra.mxu0 %v218
    %1364 = vmatpush.msra.mxu0 %v214
    %1365 = vmatpush.msra.mxu0 %v210
    %1366 = vmatmul.f32.gmra.mxu0 %v1325
    %v1367 = vpop.f32.mrf.mxu0
    %v1368 = vadd.f32 0.0, %v1367
    %1369 = vdwg.mxu0
    %1370 = vmatpush.msra.mxu0 %v271
    %1371 = vmatpush.msra.mxu0 %v267
    %1372 = vmatpush.msra.mxu0 %v263
    %1373 = vmatpush.msra.mxu0 %v259
    %1374 = vmatpush.msra.mxu0 %v255
    %1375 = vmatpush.msra.mxu0 %v251
    %1376 = vmatpush.msra.mxu0 %v247
    %1377 = vmatpush.msra.mxu0 %v243
    %1378 = vmatpush.msra.mxu0 %v239
    %1379 = vmatpush.msra.mxu0 %v235
    %1380 = vmatpush.msra.mxu0 %v231
    %1381 = vmatpush.msra.mxu0 %v227
    %1382 = vmatpush.msra.mxu0 %v223
    %1383 = vmatpush.msra.mxu0 %v219
    %1384 = vmatpush.msra.mxu0 %v215
    %1385 = vmatpush.msra.mxu0 %v211
    %1386 = vmatmul.f32.gmra.mxu0 %v1325
    %v1387 = vpop.f32.mrf.mxu0
    %v1388 = vadd.f32 0.0, %v1387
    %1389 = vdwg.mxu0
    %1390 = vmatpush.msra.mxu0 %v272
    %1391 = vmatpush.msra.mxu0 %v268
    %1392 = vmatpush.msra.mxu0 %v264
    %1393 = vmatpush.msra.mxu0 %v260
    %1394 = vmatpush.msra.mxu0 %v256
    %1395 = vmatpush.msra.mxu0 %v252
    %1396 = vmatpush.msra.mxu0 %v248
    %1397 = vmatpush.msra.mxu0 %v244
    %1398 = vmatpush.msra.mxu0 %v240
    %1399 = vmatpush.msra.mxu0 %v236
    %1400 = vmatpush.msra.mxu0 %v232
    %1401 = vmatpush.msra.mxu0 %v228
    %1402 = vmatpush.msra.mxu0 %v224
    %1403 = vmatpush.msra.mxu0 %v220
    %1404 = vmatpush.msra.mxu0 %v216
    %1405 = vmatpush.msra.mxu0 %v212
    %1406 = vmatmul.f32.gmra.mxu0 %v1325
    %v1407 = vpop.f32.mrf.mxu0
    %v1408 = vadd.f32 0.0, %v1407
    %1409 = vdwg.mxu0
    %v1410 = vadd.f32 %v1326, %v1348
    %v1411 = vadd.f32 %v1327, %v1368
    %v1412 = vadd.f32 %v1328, %v1388
    %v1413 = vadd.f32 %v1329, %v1408
    %v1414 = vxor.u32 %v1410, 2147483648
    %v1415 = vxor.u32 %v1411, 2147483648
    %v1416 = vxor.u32 %v1412, 2147483648
    %v1417 = vmul.f32 %v1414, 1.442695
    %v1418 = vpow.pop %v1417
    %v1419 = vmul.f32 %v1415, 1.442695
    %v1420 = vpow.pop %v1419
    %v1421 = vmul.f32 %v1416, 1.442695
    %v1422 = vpow.pop %v1421
    %v1423 = vadd.f32 %v1418, 1.0
    %v1424 = vadd.f32 %v1420, 1.0
    %v1425 = vadd.f32 %v1422, 1.0
    %v1426 = vrcp.pop %v1423
    %v1427 = vmul.f32 %v1423, %v1426
    %v1428 = vsub.f32 1.0, %v1427
    %v1429 = vmul.f32 %v1426, %v1428
    %v1430 = vadd.f32 %v1426, %v1429
    %vm1431 = vweird.f32 %v1423
    %vm1432 = vweird.f32 %v1426
    %vm1433 = vmor %vm1431, %vm1432
    %v1434 = vsel %vm1433, %v1426, %v1430
    %v1435 = vand.u32 2147483647, %v1423
    %vm1436 = vcmp.eq.f32.partialorder %v1435, 8.507059e+37
    %v1437 = vand.u32 %v1423, 2147483648
    %v1438 = vor.u32 1.1754944e-38, %v1437
    %v1439 = vsel %vm1436, %v1438, %v1434
    %v1440 = vmul.f32 1.0, %v1439
    %v1441 = vrcp.pop %v1424
    %v1442 = vmul.f32 %v1424, %v1441
    %v1443 = vsub.f32 1.0, %v1442
    %v1444 = vmul.f32 %v1441, %v1443
    %v1445 = vadd.f32 %v1441, %v1444
    %vm1446 = vweird.f32 %v1424
    %vm1447 = vweird.f32 %v1441
    %vm1448 = vmor %vm1446, %vm1447
    %v1449 = vsel %vm1448, %v1441, %v1445
    %v1450 = vand.u32 2147483647, %v1424
    %vm1451 = vcmp.eq.f32.partialorder %v1450, 8.507059e+37
    %v1452 = vand.u32 %v1424, 2147483648
    %v1453 = vor.u32 1.1754944e-38, %v1452
    %v1454 = vsel %vm1451, %v1453, %v1449
    %v1455 = vmul.f32 1.0, %v1454
    %v1456 = vrcp.pop %v1425
    %v1457 = vmul.f32 %v1425, %v1456
    %v1458 = vsub.f32 1.0, %v1457
    %v1459 = vmul.f32 %v1456, %v1458
    %v1460 = vadd.f32 %v1456, %v1459
    %vm1461 = vweird.f32 %v1425
    %vm1462 = vweird.f32 %v1456
    %vm1463 = vmor %vm1461, %vm1462
    %v1464 = vsel %vm1463, %v1456, %v1460
    %v1465 = vand.u32 2147483647, %v1425
    %vm1466 = vcmp.eq.f32.partialorder %v1465, 8.507059e+37
    %v1467 = vand.u32 %v1425, 2147483648
    %v1468 = vor.u32 1.1754944e-38, %v1467
    %v1469 = vsel %vm1466, %v1468, %v1464
    %v1470 = vmul.f32 1.0, %v1469
    %v1471 = vtanh.pop %v1413
    %v1472 = vmul.f32 %v1455, %v1323
    %v1473 = vmul.f32 %v1440, %v1471
    %v1474 = vadd.f32 %v1472, %v1473
    %v1475 = vtanh.pop %v1474
    %v1476 = vmul.f32 %v1470, %v1475
    %v1477 = vld [vmem:[%s4] sm:$0x1]
    %v1479 = vperm.slane %v1477, 0
    %v1481 = vmul.f32 %v1476, %v1479
    %1482 = vadd.xlane.f32.xlu0 %v1481
    %v1483 = vpop.xlane.xlu0 %1482
    %v1484 = vld [vmem:[#allocation3] sm:$0x1]
    %v1486 = vperm.slane %v1484, 0
    %v1488 = vadd.f32 %v1483, %v1486
    %vm1489 = vcmask 7168
    %1490 = vst.msk [vmem:[%s6] sm:$0xff] %vm1489, %v1488
    // Predicated region
    $region30: #{tpu_custom_call.1} parent=1 // pred_check
      _
    $region31: #{tpu_custom_call.1} parent=1 // pred_check_branch
      %1492 = sbr.rel (0) target = $region33
    $region32: #{tpu_custom_call.1} parent=1 // pred_region
      _
    $region33: #{tpu_custom_call.1} parent=1 // pred_fallthru
      _
    // Predicated region
    $region34: #{tpu_custom_call.1} parent=1 // pred_check
      _
    $region35: #{tpu_custom_call.1} parent=1 // pred_check_branch
      %1494 = sbr.rel (0) target = $region37
    $region36: #{tpu_custom_call.1} parent=1 // pred_region
      _
    $region37: #{tpu_custom_call.1} parent=1 // pred_fallthru
      _
    %1495 = vsyncpa [#allocation5], 1

</llo_original>
